<compile_context>
chip_gen: v6e
topology: v6e:2x2x1
jax: 0.10.0
libtpu: 0.0.40
codegen_flags: <defaults>
</compile_context>

<pallas_src>
import functools

import numpy as np
import jax
import jax.numpy as jnp
from jax.experimental import pallas as pl
from jax.experimental.pallas import tpu as pltpu

LANES = 128  # vector lane width; latent/band/output dims are padded to this


def _round_up(x, m):
    return (x + m - 1) // m * m


def _layout(s, ld, bands):
    """Static row layout of the packed weight slab (row-block starts 16-aligned
    so every bf16 row-slice begins on a (16,128) tile boundary)."""
    nf = bands * s * s  # flattened-window width: the single activation input
    offs = {}
    r = 0

    def add(name, rows):
        nonlocal r
        offs[name] = (r, rows)
        r = _round_up(r + rows, 16)

    add("a1", nf)      # fused [xls | xss | spectral linear1] weights over the flat window
    # hidden-input weights are stored with 128 (zero-padded) rows so they match
    # the 128-lane padded activations with no in-kernel lane slicing.
    for name in ("w2", "wms", "wd1", "wd2", "wd3"):
        add(name, LANES)
    return offs, r, nf


def _vae_kernel(flat_ref, eps_ref, w_ref, b_ref, out_ref, *, offs, ld):
    """One batch block.  Lane-band layout (requires 2*ld <= 128):
         a1  : [0,ld/4) xls(relu) | [ld/4,ld/2) xss(tanh) | [ld/2,3ld/2) spectral h1(relu)
         h2  : [0,ld)
         msv : [ld/2,ld) mean     | [ld,2ld) std-logits
         z   : [0,ld) mv bands    | [ld,2ld) sv*eps   (band-sum folded into wd1's dup rows)
         out : [0,bands) reconstruction (padded lanes hold sigmoid(0)=0.5; sliced by wrapper)
    """
    f32 = jnp.float32
    ld4, ld2 = ld // 4, ld // 2
    bb = flat_ref.shape[0]

    def wblk(name):
        r0, n = offs[name]
        return w_ref[r0:r0 + n, :]          # static row-slice view of the slab

    def brow(i):
        return b_ref[i:i + 1, :]            # (1, 128) f32 bias row

    def dot(a, w):                          # bf16 operands, f32 accumulation
        return jnp.dot(a.astype(w.dtype), w, preferred_element_type=f32)

    relu = lambda v: jnp.maximum(v, 0.0)
    lane = jax.lax.broadcasted_iota(jnp.int32, (bb, LANES), 1)

    # --- fused first matmul over the flattened window --------------------------
    # TODO(synk): SequentialSensingNet (LSTM) and LocalSensingNet (CNN) are not
    # defined in the provided source; dense tanh / relu stand-ins producing
    # (B, ld/4) each are used (their pooling is folded into the packed weights).
    a1r = dot(flat_ref[...], wblk("a1")) + brow(0)
    tanh_band = (lane >= ld4) & (lane < ld2)
    a1 = jnp.where(tanh_band, jnp.tanh(a1r), relu(a1r))   # lanes >= 3ld/2 stay 0

    # --- spectral encoder layer 2 (w2 rows nonzero only at the h1 band) --------
    h2 = relu(dot(a1, wblk("w2")) + brow(1))

    # --- merged mean/std heads: mean -> [ld/2, ld), std-logits -> [ld, 2ld) ----
    msv = dot(h2, wblk("wms")) + brow(2)

    # mv = torch.concat((xls, xss, mean), dim=1) realized as lane bands [0, ld)
    mv = jnp.where(lane < ld2, a1, jnp.where(lane < ld, msv, 0.0))
    # reparameterize: eps is packed at lanes [ld, 2ld) so it picks exactly the
    # std band of exp(msv); every other lane of eps is zero.
    z = mv + jnp.exp(msv) * eps_ref[...]
    # TODO(synk): kl_loss / homology_loss are stored as module attributes and
    # never returned by forward(); omitted here.

    # --- decoder: wd1 rows duplicated at [0,ld) and [ld,2ld) fold z's two bands
    d = relu(dot(z, wblk("wd1")) + brow(3))
    d = relu(dot(d, wblk("wd2")) + brow(4))
    logits = dot(d, wblk("wd3")) + brow(5)          # valid lanes [0, bands)

    # sigmoid via tanh identity: one EUP transcendental, no approx reciprocal
    out_ref[...] = 0.5 * (jnp.tanh(0.5 * logits) + 1.0)


def init_params(key, s, ld, bands):
    """Synthetic parameters at native widths (PyTorch Linear stored as (in, out))."""
    C = bands
    ld4, ld2 = ld // 4, ld // 2
    ks = jax.random.split(key, 18)
    w = lambda k, shape: jax.random.normal(k, shape, jnp.float32) * 0.1
    return dict(
        wss=w(ks[0], (C, ld4)),          bss=w(ks[1], (ld4,)),       # sequential-sensing stand-in
        wls=w(ks[2], (C * s * s, ld4)),  bls=w(ks[3], (ld4,)),       # local-sensing stand-in
        w1=w(ks[4], (C, ld)),            b1=w(ks[5], (ld,)),         # spectral encoder
        w2=w(ks[6], (ld, ld)),           b2=w(ks[7], (ld,)),
        wm=w(ks[8], (ld, ld2)),          bm=w(ks[9], (ld2,)),        # mean head
        ws=w(ks[10], (ld, ld)),          bs=w(ks[11], (ld,)),        # std head
        wd1=w(ks[12], (ld, ld)),         bd1=w(ks[13], (ld,)),       # decoder
        wd2=w(ks[14], (ld, ld)),         bd2=w(ks[15], (ld,)),
        wd3=w(ks[16], (ld, bands)),      bd3=w(ks[17], (bands,)),
    )


def pack_params(p, s, ld, bands, w_dtype=jnp.bfloat16):
    """Pack all 18 weights/biases into one (rows,128) bf16 weight slab and one
    (8,128) f32 bias slab.  The spatial mean-pool, center-pixel extraction and
    the mv concat of the PyTorch forward are folded into the packing, so the
    kernel sees a single flattened-window input."""
    assert ld % 4 == 0 and 2 * ld <= LANES and bands <= LANES
    offs, rows, nf = _layout(s, ld, bands)
    C = bands
    ld4, ld2 = ld // 4, ld // 2
    ctr_off = (s // 2) * s + (s // 2)            # center-pixel offset inside a window
    pn = {k: np.asarray(v, np.float32) for k, v in p.items()}

    W = np.zeros((rows, LANES), np.float32)
    r0, _ = offs["a1"]
    # local-sensing stand-in: flat window -> relu band [0, ld/4)
    W[r0:r0 + nf, 0:ld4] = pn["wls"]
    # sequential-sensing stand-in: spatial mean folded as wss/s^2 over every
    # window position of each channel -> tanh band [ld/4, ld/2)
    W[r0:r0 + nf, ld4:ld2] = np.repeat(pn["wss"] / (s * s), s * s, axis=0)
    # spectral encoder linear1: only the center pixel of each channel -> [ld/2, 3ld/2)
    W[r0 + np.arange(C) * (s * s) + ctr_off, ld2:ld2 + ld] = pn["w1"]

    r0, _ = offs["w2"];  W[r0 + ld2:r0 + ld2 + ld, 0:ld] = pn["w2"]
    r0, _ = offs["wms"]; W[r0:r0 + ld, ld2:ld] = pn["wm"]; W[r0:r0 + ld, ld:2 * ld] = pn["ws"]
    r0, _ = offs["wd1"]; W[r0:r0 + ld, 0:ld] = pn["wd1"]; W[r0 + ld:r0 + 2 * ld, 0:ld] = pn["wd1"]
    r0, _ = offs["wd2"]; W[r0:r0 + ld, 0:ld] = pn["wd2"]
    r0, _ = offs["wd3"]; W[r0:r0 + ld, 0:bands] = pn["wd3"]

    Bs = np.zeros((8, LANES), np.float32)
    Bs[0, 0:ld4] = pn["bls"]; Bs[0, ld4:ld2] = pn["bss"]; Bs[0, ld2:ld2 + ld] = pn["b1"]
    Bs[1, 0:ld] = pn["b2"]
    Bs[2, ld2:ld] = pn["bm"]; Bs[2, ld:2 * ld] = pn["bs"]
    Bs[3, 0:ld] = pn["bd1"]; Bs[4, 0:ld] = pn["bd2"]; Bs[5, 0:bands] = pn["bd3"]

    # Lane-band hygiene: every padded weight lane / bias lane MUST be exactly
    # zero, otherwise the lane-band concat / duplicated-row fold silently corrupts.
    pad_col = max(2 * ld, ld2 + ld, bands)
    assert not W[:, pad_col:].any(), "padded weight lanes must be zero"
    assert not Bs[:, pad_col:].any() and not Bs[6:].any(), "padded bias lanes must be zero"
    return jnp.asarray(W, w_dtype), jnp.asarray(Bs, jnp.float32)


@functools.partial(jax.jit, static_argnames=("s", "ld", "bands", "block_b"))
def spatial_revised_vae(x, eps, w_slab, b_slab, *, s, ld, bands, block_b=512):
    """x: (B, bands, s, s) pixel windows (NCHW); eps: (B, ld) N(0,1) sample."""
    B, C, H, Wd = x.shape
    assert C == bands and H == s and Wd == s
    offs, rows, nf = _layout(s, ld, bands)
    assert w_slab.shape == (rows, LANES) and b_slab.shape == (8, LANES)

    # Single flat bf16 input: pooling / center-pixel / concat are folded into the
    # packed weight slab, so there is no host-side feature glue.
    # TODO(synk): utils.extract_sequential_data / extract_spectral_data were not
    # provided; spatial mean-pool and center-pixel stand-ins are folded into pack_params.
    flat = x.reshape(B, nf).astype(w_slab.dtype)
    # eps goes to lanes [ld, 2ld): the sv*eps perturbation band (see kernel docstring).
    eps_p = jnp.zeros((B, LANES), jnp.float32).at[:, ld:2 * ld].set(eps)

    # Batch tiling: block rows a multiple of 8; target >= 8 grid steps
    # (>= 4 per TensorCore on a 2-TC v7x) so the input DMA pipelines behind compute.
    target_steps = 8
    bb = min(block_b, -(-B // target_steps))
    bb = _round_up(max(bb, 8), 8)
    Bp = _round_up(B, bb)
    if Bp != B:
        flat = jnp.pad(flat, ((0, Bp - B), (0, 0)))
        eps_p = jnp.pad(eps_p, ((0, Bp - B), (0, 0)))

    kernel = functools.partial(_vae_kernel, offs=offs, ld=ld)
    out = pl.pallas_call(
        kernel,
        out_shape=jax.ShapeDtypeStruct((Bp, LANES), jnp.float32),
        grid=(Bp // bb,),
        in_specs=[
            pl.BlockSpec((bb, nf), lambda i: (i, 0)),
            pl.BlockSpec((bb, LANES), lambda i: (i, 0)),
            # Parameter slabs: constant index_map + single-buffered => fetched once,
            # VMEM-resident across the whole grid, no second buffer allocated.
            pl.BlockSpec((rows, LANES), lambda i: (0, 0), pipeline_mode=pl.Buffered(1)),
            pl.BlockSpec((8, LANES), lambda i: (0, 0), pipeline_mode=pl.Buffered(1)),
        ],
        out_specs=pl.BlockSpec((bb, LANES), lambda i: (i, 0)),
        # VMEM footprint at bb<=512 is ~3 MiB; no vmem_limit_bytes needed. Re-derive
        # the budget before scaling block_b past ~2048 on v7x (64 MiB physical VMEM).
        compiler_params=pltpu.CompilerParams(dimension_semantics=("parallel",)),
    )(flat, eps_p, w_slab, b_slab)
    # Lane-dense (bb,128) stores; only [:, :bands] is meaningful (padded lanes hold
    # sigmoid(0)=0.5).  Output kept f32; switch out_shape to bf16 if the consumer tolerates it.
    return out[:B, :bands]


def _reference_forward(x, eps, p, s, ld, bands):
    """Pure-JAX reference mirroring the PyTorch forward (bf16 at dot boundaries)."""
    q = lambda a: a.astype(jnp.bfloat16).astype(jnp.float32)
    dot = lambda a, w: jnp.dot(q(a), q(w), preferred_element_type=jnp.float32)
    relu = jax.nn.relu
    B = x.shape[0]
    seq = jnp.mean(x, axis=(2, 3))
    flat = x.reshape(B, -1)
    ctr = x[:, :, s // 2, s // 2]
    xls = relu(dot(flat, p["wls"]) + p["bls"])
    xss = jnp.tanh(dot(seq, p["wss"]) + p["bss"])
    h = relu(dot(ctr, p["w1"]) + p["b1"])
    h = relu(dot(h, p["w2"]) + p["b2"])
    mean = dot(h, p["wm"]) + p["bm"]
    sv = jnp.exp(dot(h, p["ws"]) + p["bs"])
    mv = jnp.concatenate([xls, xss, mean], axis=1)
    z = mv + sv * eps
    d = relu(dot(z, p["wd1"]) + p["bd1"])
    d = relu(dot(d, p["wd2"]) + p["bd2"])
    return jax.nn.sigmoid(dot(d, p["wd3"]) + p["bd3"])


if __name__ == "__main__":
    s, ld, bands = 5, 16, 32          # ld must be a multiple of 4 (and <= 64 here)
    B = 1024                          # pixel windows batched through the grid (8 grid steps)
    key = jax.random.PRNGKey(0)
    kx, keps, kp = jax.random.split(key, 3)

    x = jax.random.uniform(kx, (B, bands, s, s), jnp.float32)   # NCHW pixel windows
    eps = jax.random.normal(keps, (B, ld), jnp.float32)         # N(0,1) reparam sample
    raw = init_params(kp, s, ld, bands)
    w_slab, b_slab = pack_params(raw, s, ld, bands, w_dtype=jnp.bfloat16)

    out = spatial_revised_vae(x, eps, w_slab, b_slab,
                              s=s, ld=ld, bands=bands, block_b=512)
    jax.block_until_ready(out)

    ref = _reference_forward(x, eps, raw, s, ld, bands)
    assert out.shape == (B, bands) and out.dtype == jnp.float32
    assert bool(jnp.all(jnp.isfinite(out)))
    assert bool(jnp.allclose(out, ref, atol=2e-2, rtol=2e-2))
    print("KERNEL_OK")
</pallas_src>

<mosaic_0001>
module attributes {stable_mosaic.version = 11 : i64} {
  func.func @_vae_kernel(%arg0: i32, %arg1: memref<128x800xbf16, #tpu.memory_space<vmem>>, %arg2: memref<128x128xf32, #tpu.memory_space<vmem>>, %arg3: memref<1440x128xbf16, #tpu.memory_space<vmem>>, %arg4: memref<8x128xf32, #tpu.memory_space<vmem>>, %arg5: memref<128x128xf32, #tpu.memory_space<vmem>>) attributes {dimension_semantics = [#tpu.dimension_semantics<parallel>], iteration_bounds = array<i64: 8>, scalar_prefetch = 0 : i64, scratch_operands = 0 : i64, tpu.core_type = #tpu.core_type<tc>, window_params = [{transform_indices = @transform_0, window_bounds = array<i64: 128, 800>}, {transform_indices = @transform_1, window_bounds = array<i64: 128, 128>}, {pipeline_mode = #tpu.pipeline_mode<synchronous>, transform_indices = @transform_2, window_bounds = array<i64: 1440, 128>}, {pipeline_mode = #tpu.pipeline_mode<synchronous>, transform_indices = @transform_3, window_bounds = array<i64: 8, 128>}, {transform_indices = @transform_4, window_bounds = array<i64: 128, 128>}]} {
    %0 = tpu.iota {dimensions = array<i32: 1>} : vector<128x128xi32>
    %c0 = arith.constant 0 : index
    %c0_0 = arith.constant 0 : index
    %1 = vector.load %arg1[%c0, %c0_0] : memref<128x800xbf16, #tpu.memory_space<vmem>>, vector<128x800xbf16>
    %c0_1 = arith.constant 0 : index
    %c0_2 = arith.constant 0 : index
    %2 = vector.load %arg3[%c0_1, %c0_2] : memref<1440x128xbf16, #tpu.memory_space<vmem>>, vector<800x128xbf16>
    %cst = arith.constant dense<0.000000e+00> : vector<128x128xf32>
    %3 = tpu.matmul %1, %2, %cst {dimension_numbers = #tpu.dot_dimension_numbers<[1], [0], [0], [1], [0, 0, 1, 1], [], []>} : vector<128x800xbf16>, vector<800x128xbf16>, vector<128x128xf32> -> vector<128x128xf32>
    %c0_3 = arith.constant 0 : index
    %c0_4 = arith.constant 0 : index
    %4 = vector.load %arg4[%c0_3, %c0_4] : memref<8x128xf32, #tpu.memory_space<vmem>>, vector<1x128xf32>
    %5 = vector.broadcast %4 : vector<1x128xf32> to vector<128x128xf32>
    %6 = arith.addf %3, %5 : vector<128x128xf32>
    %c4_i32 = arith.constant 4 : i32
    %7 = vector.broadcast %c4_i32 : i32 to vector<128x128xi32>
    %8 = arith.cmpi sge, %0, %7 : vector<128x128xi32>
    %c8_i32 = arith.constant 8 : i32
    %9 = vector.broadcast %c8_i32 : i32 to vector<128x128xi32>
    %10 = arith.cmpi slt, %0, %9 : vector<128x128xi32>
    %11 = arith.andi %8, %10 : vector<128x128xi1>
    %12 = math.tanh %6 : vector<128x128xf32>
    %cst_5 = arith.constant 0.000000e+00 : f32
    %13 = vector.broadcast %cst_5 : f32 to vector<128x128xf32>
    %14 = arith.maximumf %6, %13 : vector<128x128xf32>
    %15 = arith.select %11, %12, %14 : vector<128x128xi1>, vector<128x128xf32>
    %c800 = arith.constant 800 : index
    %c0_6 = arith.constant 0 : index
    %16 = vector.load %arg3[%c800, %c0_6] : memref<1440x128xbf16, #tpu.memory_space<vmem>>, vector<128x128xbf16>
    %17 = arith.truncf %15 : vector<128x128xf32> to vector<128x128xbf16>
    %cst_7 = arith.constant dense<0.000000e+00> : vector<128x128xf32>
    %18 = tpu.matmul %17, %16, %cst_7 {dimension_numbers = #tpu.dot_dimension_numbers<[1], [0], [0], [1], [0, 0, 1, 1], [], []>} : vector<128x128xbf16>, vector<128x128xbf16>, vector<128x128xf32> -> vector<128x128xf32>
    %c1 = arith.constant 1 : index
    %c0_8 = arith.constant 0 : index
    %19 = vector.load %arg4[%c1, %c0_8] : memref<8x128xf32, #tpu.memory_space<vmem>>, vector<1x128xf32>
    %20 = vector.broadcast %19 : vector<1x128xf32> to vector<128x128xf32>
    %21 = arith.addf %18, %20 : vector<128x128xf32>
    %cst_9 = arith.constant 0.000000e+00 : f32
    %22 = vector.broadcast %cst_9 : f32 to vector<128x128xf32>
    %23 = arith.maximumf %21, %22 : vector<128x128xf32>
    %c928 = arith.constant 928 : index
    %c0_10 = arith.constant 0 : index
    %24 = vector.load %arg3[%c928, %c0_10] : memref<1440x128xbf16, #tpu.memory_space<vmem>>, vector<128x128xbf16>
    %25 = arith.truncf %23 : vector<128x128xf32> to vector<128x128xbf16>
    %cst_11 = arith.constant dense<0.000000e+00> : vector<128x128xf32>
    %26 = tpu.matmul %25, %24, %cst_11 {dimension_numbers = #tpu.dot_dimension_numbers<[1], [0], [0], [1], [0, 0, 1, 1], [], []>} : vector<128x128xbf16>, vector<128x128xbf16>, vector<128x128xf32> -> vector<128x128xf32>
    %c2 = arith.constant 2 : index
    %c0_12 = arith.constant 0 : index
    %27 = vector.load %arg4[%c2, %c0_12] : memref<8x128xf32, #tpu.memory_space<vmem>>, vector<1x128xf32>
    %28 = vector.broadcast %27 : vector<1x128xf32> to vector<128x128xf32>
    %29 = arith.addf %26, %28 : vector<128x128xf32>
    %c8_i32_13 = arith.constant 8 : i32
    %30 = vector.broadcast %c8_i32_13 : i32 to vector<128x128xi32>
    %31 = arith.cmpi slt, %0, %30 : vector<128x128xi32>
    %c16_i32 = arith.constant 16 : i32
    %32 = vector.broadcast %c16_i32 : i32 to vector<128x128xi32>
    %33 = arith.cmpi slt, %0, %32 : vector<128x128xi32>
    %cst_14 = arith.constant 0.000000e+00 : f32
    %34 = vector.broadcast %cst_14 : f32 to vector<128x128xf32>
    %35 = arith.select %33, %29, %34 : vector<128x128xi1>, vector<128x128xf32>
    %36 = arith.select %31, %15, %35 : vector<128x128xi1>, vector<128x128xf32>
    %37 = math.exp %29 : vector<128x128xf32>
    %c0_15 = arith.constant 0 : index
    %c0_16 = arith.constant 0 : index
    %38 = vector.load %arg2[%c0_15, %c0_16] : memref<128x128xf32, #tpu.memory_space<vmem>>, vector<128x128xf32>
    %39 = arith.mulf %37, %38 : vector<128x128xf32>
    %40 = arith.addf %36, %39 : vector<128x128xf32>
    %c1056 = arith.constant 1056 : index
    %c0_17 = arith.constant 0 : index
    %41 = vector.load %arg3[%c1056, %c0_17] : memref<1440x128xbf16, #tpu.memory_space<vmem>>, vector<128x128xbf16>
    %42 = arith.truncf %40 : vector<128x128xf32> to vector<128x128xbf16>
    %cst_18 = arith.constant dense<0.000000e+00> : vector<128x128xf32>
    %43 = tpu.matmul %42, %41, %cst_18 {dimension_numbers = #tpu.dot_dimension_numbers<[1], [0], [0], [1], [0, 0, 1, 1], [], []>} : vector<128x128xbf16>, vector<128x128xbf16>, vector<128x128xf32> -> vector<128x128xf32>
    %c3 = arith.constant 3 : index
    %c0_19 = arith.constant 0 : index
    %44 = vector.load %arg4[%c3, %c0_19] : memref<8x128xf32, #tpu.memory_space<vmem>>, vector<1x128xf32>
    %45 = vector.broadcast %44 : vector<1x128xf32> to vector<128x128xf32>
    %46 = arith.addf %43, %45 : vector<128x128xf32>
    %cst_20 = arith.constant 0.000000e+00 : f32
    %47 = vector.broadcast %cst_20 : f32 to vector<128x128xf32>
    %48 = arith.maximumf %46, %47 : vector<128x128xf32>
    %c1184 = arith.constant 1184 : index
    %c0_21 = arith.constant 0 : index
    %49 = vector.load %arg3[%c1184, %c0_21] : memref<1440x128xbf16, #tpu.memory_space<vmem>>, vector<128x128xbf16>
    %50 = arith.truncf %48 : vector<128x128xf32> to vector<128x128xbf16>
    %cst_22 = arith.constant dense<0.000000e+00> : vector<128x128xf32>
    %51 = tpu.matmul %50, %49, %cst_22 {dimension_numbers = #tpu.dot_dimension_numbers<[1], [0], [0], [1], [0, 0, 1, 1], [], []>} : vector<128x128xbf16>, vector<128x128xbf16>, vector<128x128xf32> -> vector<128x128xf32>
    %c4 = arith.constant 4 : index
    %c0_23 = arith.constant 0 : index
    %52 = vector.load %arg4[%c4, %c0_23] : memref<8x128xf32, #tpu.memory_space<vmem>>, vector<1x128xf32>
    %53 = vector.broadcast %52 : vector<1x128xf32> to vector<128x128xf32>
    %54 = arith.addf %51, %53 : vector<128x128xf32>
    %cst_24 = arith.constant 0.000000e+00 : f32
    %55 = vector.broadcast %cst_24 : f32 to vector<128x128xf32>
    %56 = arith.maximumf %54, %55 : vector<128x128xf32>
    %c1312 = arith.constant 1312 : index
    %c0_25 = arith.constant 0 : index
    %57 = vector.load %arg3[%c1312, %c0_25] : memref<1440x128xbf16, #tpu.memory_space<vmem>>, vector<128x128xbf16>
    %58 = arith.truncf %56 : vector<128x128xf32> to vector<128x128xbf16>
    %cst_26 = arith.constant dense<0.000000e+00> : vector<128x128xf32>
    %59 = tpu.matmul %58, %57, %cst_26 {dimension_numbers = #tpu.dot_dimension_numbers<[1], [0], [0], [1], [0, 0, 1, 1], [], []>} : vector<128x128xbf16>, vector<128x128xbf16>, vector<128x128xf32> -> vector<128x128xf32>
    %c5 = arith.constant 5 : index
    %c0_27 = arith.constant 0 : index
    %60 = vector.load %arg4[%c5, %c0_27] : memref<8x128xf32, #tpu.memory_space<vmem>>, vector<1x128xf32>
    %61 = vector.broadcast %60 : vector<1x128xf32> to vector<128x128xf32>
    %62 = arith.addf %59, %61 : vector<128x128xf32>
    %cst_28 = arith.constant 5.000000e-01 : f32
    %63 = vector.broadcast %cst_28 : f32 to vector<128x128xf32>
    %64 = arith.mulf %63, %62 : vector<128x128xf32>
    %65 = math.tanh %64 : vector<128x128xf32>
    %cst_29 = arith.constant 1.000000e+00 : f32
    %66 = vector.broadcast %cst_29 : f32 to vector<128x128xf32>
    %67 = arith.addf %65, %66 : vector<128x128xf32>
    %cst_30 = arith.constant 5.000000e-01 : f32
    %68 = vector.broadcast %cst_30 : f32 to vector<128x128xf32>
    %69 = arith.mulf %68, %67 : vector<128x128xf32>
    %c0_31 = arith.constant 0 : index
    %c0_32 = arith.constant 0 : index
    %70 = vector.load %arg5[%c0_31, %c0_32] : memref<128x128xf32, #tpu.memory_space<vmem>>, vector<128x128xf32>
    tpu.vector_store %arg5[%c0_31, %c0_32], %69 {strides = array<i32>} : memref<128x128xf32, #tpu.memory_space<vmem>>, vector<128x128xf32>,
    return
  }
  func.func @transform_0(%arg0: i32) -> (i32, i32) {
    %c0_i32 = arith.constant 0 : i32
    %c0_i32_0 = arith.constant 0 : i32
    return %arg0, %c0_i32 : i32, i32
  }
  func.func @transform_1(%arg0: i32) -> (i32, i32) {
    %c0_i32 = arith.constant 0 : i32
    %c0_i32_0 = arith.constant 0 : i32
    return %arg0, %c0_i32 : i32, i32
  }
  func.func @transform_2(%arg0: i32) -> (i32, i32) {
    %c0_i32 = arith.constant 0 : i32
    %c0_i32_0 = arith.constant 0 : i32
    %c0_i32_1 = arith.constant 0 : i32
    return %c0_i32, %c0_i32_0 : i32, i32
  }
  func.func @transform_3(%arg0: i32) -> (i32, i32) {
    %c0_i32 = arith.constant 0 : i32
    %c0_i32_0 = arith.constant 0 : i32
    %c0_i32_1 = arith.constant 0 : i32
    return %c0_i32, %c0_i32_0 : i32, i32
  }
  func.func @transform_4(%arg0: i32) -> (i32, i32) {
    %c0_i32 = arith.constant 0 : i32
    %c0_i32_0 = arith.constant 0 : i32
    return %arg0, %c0_i32 : i32, i32
  }
}

</mosaic_0001>

<llo_original>
// kernel: spatial_revised_vae.1
$region0: #{spatial_revised_vae.1}
  #allocation0 [shape = 'u32[]', space=smem, size = 0x4, offset = 0x4, fixed_abs, tag = 'smem constant byte address 0x4 - core index']
  #allocation1 [shape = 'u32[144,128]{1,0:T(1,128)}', space=vmem, size = 0x12000, scoped, tag = 'internal scratch']
  %s0 = inlined_call_operand.vmem [shape: bf16[1024,800], index: 0, kind: input, shape index: {}]
  %s1 = inlined_call_operand.vmem [shape: f32[1024,128], index: 1, kind: input, shape index: {}]
  %s2 = inlined_call_operand.vmem [shape: bf16[1440,128], index: 2, kind: input, shape index: {}]
  %s3 = inlined_call_operand.vmem [shape: f32[8,128], index: 3, kind: input, shape index: {}]
  %s4 = inlined_call_operand.vmem [shape: f32[1024,128], index: 4, kind: output, shape index: {}]
  %s5 = sld [smem:[#allocation0]]
  $region49: #{spatial_revised_vae.1} parent=0
    _
  %s7 = ssub.s32 1, %s5
  %s8 = scalar_select 0, %s7, %s5
  loop: start=0, step=1, limit=10
  $region2: #{spatial_revised_vae.1} parent=0 // loop_pre_header
    _
  $region3: #{spatial_revised_vae.1} parent=0 // loop_header
    %s10 = sphi 0, %s14
    %p11 = scmp.ge.s32.totalorder %s10, 10
    %s20 = sphi 0, %s22
    %s23 = sphi 0, %s20
    %s24 = sphi 0, %s23
    %s40 = sphi 0, %s24
    %s46 = sphi 0, %s48
    %s49 = sphi 0, %s46
    %s50 = sphi 0, %s49
    %s66 = sphi 0, %s50
    %s70 = sphi 0, %s70
    %s72 = sphi 0, %s70
    %s73 = sphi 0, %s72
    %s87 = sphi 0, %s73
    %s91 = sphi 0, %s91
    %s93 = sphi 0, %s91
    %s94 = sphi 0, %s93
    %s108 = sphi 0, %s94
    %s114 = sphi 0, %s116
    %s117 = sphi 0, %s114
    %s118 = sphi 0, %s117
    %s134 = sphi 0, %s118
  $region4: #{spatial_revised_vae.1} parent=0 // loop_header_branch
    %13 = sbr.rel (%p11) target = $region8
  $region5: #{spatial_revised_vae.1} parent=0 // loop_body
    %s15 = ssub.s32 %s10, 1
    %s16 = ssub.s32 %s10, 2
    %s17 = sadd.s32 %s10, 1
    %s18 = ssub.s32 %s10, %s17
    %p19 = scmp.eq.s32.totalorder %s18, 0
    %s21 = sadd.s32 %s20, 1
    %s22 = scalar_select %p19, %s20, %s21
    %p25 = pneg %p19
    %p26 = scmp.eq.s32.totalorder %s10, 7
    %p27 = por %p25, %p26
    %p28 = scmp.ne.s32.totalorder %s20, %s23
    %p29 = scmp.eq.s32.totalorder %s10, 0
    %p30 = por %p28, %p29
    %p31 = scmp.ne.s32.totalorder %s20, %s23
    %p32 = scmp.eq.s32.totalorder %s15, 7
    %p33 = por %p31, %p32
    %p34 = scmp.ne.s32.totalorder %s23, %s24
    %p35 = scmp.eq.s32.totalorder %s15, 0
    %p36 = por %p34, %p35
    %p37 = scmp.ne.s32.totalorder %s23, %s24
    %p38 = scmp.eq.s32.totalorder %s16, 7
    %p39 = por %p37, %p38
    %p41 = scmp.ne.s32.totalorder %s24, %s40
    %p42 = scmp.eq.s32.totalorder %s16, 0
    %p43 = por %p41, %p42
    %s44 = ssub.s32 %s10, %s17
    %p45 = scmp.eq.s32.totalorder %s44, 0
    %s47 = sadd.s32 %s46, 1
    %s48 = scalar_select %p45, %s46, %s47
    %p51 = pneg %p45
    %p52 = scmp.eq.s32.totalorder %s10, 7
    %p53 = por %p51, %p52
    %p54 = scmp.ne.s32.totalorder %s46, %s49
    %p55 = scmp.eq.s32.totalorder %s10, 0
    %p56 = por %p54, %p55
    %p57 = scmp.ne.s32.totalorder %s46, %s49
    %p58 = scmp.eq.s32.totalorder %s15, 7
    %p59 = por %p57, %p58
    %p60 = scmp.ne.s32.totalorder %s49, %s50
    %p61 = scmp.eq.s32.totalorder %s15, 0
    %p62 = por %p60, %p61
    %p63 = scmp.ne.s32.totalorder %s49, %s50
    %p64 = scmp.eq.s32.totalorder %s16, 7
    %p65 = por %p63, %p64
    %p67 = scmp.ne.s32.totalorder %s50, %s66
    %p68 = scmp.eq.s32.totalorder %s16, 0
    %p69 = por %p67, %p68
    %s71 = sadd.s32 %s70, 1
    %p74 = scmp.eq.s32.totalorder %s10, 7
    %p75 = scmp.ne.s32.totalorder %s70, %s72
    %p76 = scmp.eq.s32.totalorder %s10, 0
    %p77 = por %p75, %p76
    %p78 = scmp.ne.s32.totalorder %s70, %s72
    %p79 = scmp.eq.s32.totalorder %s15, 7
    %p80 = por %p78, %p79
    %p81 = scmp.ne.s32.totalorder %s72, %s73
    %p82 = scmp.eq.s32.totalorder %s15, 0
    %p83 = por %p81, %p82
    %p84 = scmp.ne.s32.totalorder %s72, %s73
    %p85 = scmp.eq.s32.totalorder %s16, 7
    %p86 = por %p84, %p85
    %p88 = scmp.ne.s32.totalorder %s73, %s87
    %p89 = scmp.eq.s32.totalorder %s16, 0
    %p90 = por %p88, %p89
    %s92 = sadd.s32 %s91, 1
    %p95 = scmp.eq.s32.totalorder %s10, 7
    %p96 = scmp.ne.s32.totalorder %s91, %s93
    %p97 = scmp.eq.s32.totalorder %s10, 0
    %p98 = por %p96, %p97
    %p99 = scmp.ne.s32.totalorder %s91, %s93
    %p100 = scmp.eq.s32.totalorder %s15, 7
    %p101 = por %p99, %p100
    %p102 = scmp.ne.s32.totalorder %s93, %s94
    %p103 = scmp.eq.s32.totalorder %s15, 0
    %p104 = por %p102, %p103
    %p105 = scmp.ne.s32.totalorder %s93, %s94
    %p106 = scmp.eq.s32.totalorder %s16, 7
    %p107 = por %p105, %p106
    %p109 = scmp.ne.s32.totalorder %s94, %s108
    %p110 = scmp.eq.s32.totalorder %s16, 0
    %p111 = por %p109, %p110
    %s112 = ssub.s32 %s10, %s17
    %p113 = scmp.eq.s32.totalorder %s112, 0
    %s115 = sadd.s32 %s114, 1
    %s116 = scalar_select %p113, %s114, %s115
    %p119 = pneg %p113
    %p120 = scmp.eq.s32.totalorder %s10, 7
    %p121 = por %p119, %p120
    %p122 = scmp.ne.s32.totalorder %s114, %s117
    %p123 = scmp.eq.s32.totalorder %s10, 0
    %p124 = por %p122, %p123
    %p125 = scmp.ne.s32.totalorder %s114, %s117
    %p126 = scmp.eq.s32.totalorder %s15, 7
    %p127 = por %p125, %p126
    %p128 = scmp.ne.s32.totalorder %s117, %s118
    %p129 = scmp.eq.s32.totalorder %s15, 0
    %p130 = por %p128, %p129
    %p131 = scmp.ne.s32.totalorder %s117, %s118
    %p132 = scmp.eq.s32.totalorder %s16, 7
    %p133 = por %p131, %p132
    %p135 = scmp.ne.s32.totalorder %s118, %s134
    %p136 = scmp.eq.s32.totalorder %s16, 0
    %p137 = por %p135, %p136
    %p138 = scmp.le.s32.totalorder 1, %s10
    %p139 = scmp.lt.s32.totalorder %s10, 9
    %p140 = pnand %p138, %p139
    %p141 = pneg %p140
    // Predicated region
    $region9: #{spatial_revised_vae.1} parent=5 // pred_check
      _
    $region10: #{spatial_revised_vae.1} parent=5 // pred_check_branch
      %143 = sbr.rel (%p140) target = $region12
    $region11: #{spatial_revised_vae.1} parent=5 // pred_region
      %s144 = ssub.s32 %s10, 1
      // Predicated region
      $region13: #{spatial_revised_vae.1} parent=11 // pred_check
        %p145 = pneg %p83
      $region14: #{spatial_revised_vae.1} parent=11 // pred_check_branch
        %147 = sbr.rel (%p145) target = $region16
      $region15: #{spatial_revised_vae.1} parent=11 // pred_region
        _
      $region16: #{spatial_revised_vae.1} parent=11 // pred_fallthru
        _
      // Predicated region
      $region17: #{spatial_revised_vae.1} parent=11 // pred_check
        %p148 = pneg %p104
      $region18: #{spatial_revised_vae.1} parent=11 // pred_check_branch
        %150 = sbr.rel (%p148) target = $region20
      $region19: #{spatial_revised_vae.1} parent=11 // pred_region
        _
      $region20: #{spatial_revised_vae.1} parent=11 // pred_fallthru
        _
    $region12: #{spatial_revised_vae.1} parent=5 // pred_fallthru
      _
    %p151 = scmp.lt.s32.totalorder %s10, 8
    // Predicated region
    $region21: #{spatial_revised_vae.1} parent=5 // pred_check
      %p152 = pneg %p151
    $region22: #{spatial_revised_vae.1} parent=5 // pred_check_branch
      %154 = sbr.rel (%p152) target = $region24
    $region23: #{spatial_revised_vae.1} parent=5 // pred_region
      // Predicated region
      $region25: #{spatial_revised_vae.1} parent=23 // pred_check
        %p155 = pneg %p30
      $region26: #{spatial_revised_vae.1} parent=23 // pred_check_branch
        %157 = sbr.rel (%p155) target = $region28
      $region27: #{spatial_revised_vae.1} parent=23 // pred_region
        %s158 = smul.u32 16, %s10
        %p159 = scmp.lt.s32.totalorder %s158, 127
        %s160 = scalar_select %p159, %s158, 127
        %s161 = smul.addr %s160, 7
        %s162 = smul.addr %s161, 4
        %s163 = scalar_lea.vmem %s0, %s162
        %s164 = smul.u32 16, %s10
      $region28: #{spatial_revised_vae.1} parent=23 // pred_fallthru
        _
      // Predicated region
      $region29: #{spatial_revised_vae.1} parent=23 // pred_check
        %p165 = pneg %p56
      $region30: #{spatial_revised_vae.1} parent=23 // pred_check_branch
        %167 = sbr.rel (%p165) target = $region32
      $region31: #{spatial_revised_vae.1} parent=23 // pred_region
        %s168 = smul.u32 16, %s10
        %p169 = scmp.lt.s32.totalorder %s168, 127
        %s170 = scalar_select %p169, %s168, 127
        %s171 = smul.addr %s170, 8
        %s172 = scalar_lea.vmem %s1, %s171
        %s173 = smul.u32 16, %s10
      $region32: #{spatial_revised_vae.1} parent=23 // pred_fallthru
        _
    $region24: #{spatial_revised_vae.1} parent=5 // pred_fallthru
      _
    %p174 = scmp.le.s32.totalorder 1, %s10
    %p175 = scmp.lt.s32.totalorder %s10, 9
    %p176 = pnand %p174, %p175
    %p177 = pneg %p176
    // Predicated region
    $region33: #{spatial_revised_vae.1} parent=5 // pred_check
      _
    $region34: #{spatial_revised_vae.1} parent=5 // pred_check_branch
      %179 = sbr.rel (%p176) target = $region36
    $region35: #{spatial_revised_vae.1} parent=5 // pred_region
      %s180 = ssub.s32 %s10, 1
      %s181 = smul.u32 16, %s15
      %p182 = scmp.lt.s32.totalorder %s181, 127
      %s183 = scalar_select %p182, %s181, 127
      %s184 = smul.addr %s183, 7
      %s185 = smul.addr %s184, 4
      %s186 = scalar_lea.vmem %s0, %s185
      %p187 = pneg %p36
      %p188 = pneg %p33
      %s189 = smul.u32 16, %s15
      %p190 = scmp.lt.s32.totalorder %s189, 127
      %s191 = scalar_select %p190, %s189, 127
      %s192 = smul.addr %s191, 8
      %s193 = scalar_lea.vmem %s1, %s192
      %p194 = pneg %p62
      %p195 = pneg %p59
      %p196 = pneg %p83
      %p197 = pneg %p80
      %p198 = pneg %p104
      %p199 = pneg %p101
      %p200 = pneg %p130
      %p201 = pneg %p127
      %s202 = smul.u32 16, %s15
      %p203 = scmp.lt.s32.totalorder %s202, 127
      %s204 = scalar_select %p203, %s202, 127
      %s205 = smul.addr %s204, 8
      %s206 = scalar_lea.vmem %s4, %s205
      %s207 = smul.u32 16, %s15
      %p208 = scmp.lt.s32.totalorder %s207, 127
      %s209 = scalar_select %p208, %s207, 127
      %s210 = smul.addr %s209, 7
      %s211 = smul.addr %s210, 4
      %s212 = scalar_lea.vmem %s0, %s211
      %s213 = smul.u32 16, %s15
      %s214 = smul.u32 16, %s15
      %p215 = scmp.lt.s32.totalorder %s214, 127
      %s216 = scalar_select %p215, %s214, 127
      %s217 = smul.addr %s216, 8
      %s218 = scalar_lea.vmem %s1, %s217
      %s219 = smul.u32 16, %s15
      %s220 = smul.u32 16, %s15
      %p221 = scmp.lt.s32.totalorder %s220, 127
      %s222 = scalar_select %p221, %s220, 127
      %s223 = smul.addr %s222, 8
      %s224 = scalar_lea.vmem %s4, %s223
      %s225 = smul.u32 16, %s15
      %v227 = vlaneseq
      %v228 = vand.u32 %v227, 127
      %v229 = vld [vmem:[%s212] sm:$0xff]
      %v230 = vld [vmem:[%s212 + $0x8] sm:$0xff]
      %v231 = vld [vmem:[%s212 + $0x10] sm:$0xff]
      %v232 = vld [vmem:[%s212 + $0x18] sm:$0xf]
      %v233 = vld [vmem:[%s212 + $0x1c] sm:$0xff]
      %v234 = vld [vmem:[%s212 + $0x24] sm:$0xff]
      %v235 = vld [vmem:[%s212 + $0x2c] sm:$0xff]
      %v236 = vld [vmem:[%s212 + $0x34] sm:$0xf]
      %v237 = vld [vmem:[%s212 + $0x38] sm:$0xff]
      %v238 = vld [vmem:[%s212 + $0x40] sm:$0xff]
      %v239 = vld [vmem:[%s212 + $0x48] sm:$0xff]
      %v240 = vld [vmem:[%s212 + $0x50] sm:$0xf]
      %v241 = vld [vmem:[%s212 + $0x54] sm:$0xff]
      %v242 = vld [vmem:[%s212 + $0x5c] sm:$0xff]
      %v243 = vld [vmem:[%s212 + $0x64] sm:$0xff]
      %v244 = vld [vmem:[%s212 + $0x6c] sm:$0xf]
      %v245 = vld [vmem:[%s212 + $0x70] sm:$0xff]
      %v246 = vld [vmem:[%s212 + $0x78] sm:$0xff]
      %v247 = vld [vmem:[%s212 + $0x80] sm:$0xff]
      %v248 = vld [vmem:[%s212 + $0x88] sm:$0xf]
      %v249 = vld [vmem:[%s212 + $0x8c] sm:$0xff]
      %v250 = vld [vmem:[%s212 + $0x94] sm:$0xff]
      %v251 = vld [vmem:[%s212 + $0x9c] sm:$0xff]
      %v252 = vld [vmem:[%s212 + $0xa4] sm:$0xf]
      %v253 = vld [vmem:[%s212 + $0xa8] sm:$0xff]
      %v254 = vld [vmem:[%s212 + $0xb0] sm:$0xff]
      %v255 = vld [vmem:[%s212 + $0xb8] sm:$0xff]
      %v256 = vld [vmem:[%s212 + $0xc0] sm:$0xf]
      %v257 = vld [vmem:[%s212 + $0xc4] sm:$0xff]
      %v258 = vld [vmem:[%s212 + $0xcc] sm:$0xff]
      %v259 = vld [vmem:[%s212 + $0xd4] sm:$0xff]
      %v260 = vld [vmem:[%s212 + $0xdc] sm:$0xf]
      %v261 = vld [vmem:[%s212 + $0xe0] sm:$0xff]
      %v262 = vld [vmem:[%s212 + $0xe8] sm:$0xff]
      %v263 = vld [vmem:[%s212 + $0xf0] sm:$0xff]
      %v264 = vld [vmem:[%s212 + $0xf8] sm:$0xf]
      %v265 = vld [vmem:[%s212 + $0xfc] sm:$0xff]
      %v266 = vld [vmem:[%s212 + $0x104] sm:$0xff]
      %v267 = vld [vmem:[%s212 + $0x10c] sm:$0xff]
      %v268 = vld [vmem:[%s212 + $0x114] sm:$0xf]
      %v269 = vld [vmem:[%s212 + $0x118] sm:$0xff]
      %v270 = vld [vmem:[%s212 + $0x120] sm:$0xff]
      %v271 = vld [vmem:[%s212 + $0x128] sm:$0xff]
      %v272 = vld [vmem:[%s212 + $0x130] sm:$0xf]
      %v273 = vld [vmem:[%s212 + $0x134] sm:$0xff]
      %v274 = vld [vmem:[%s212 + $0x13c] sm:$0xff]
      %v275 = vld [vmem:[%s212 + $0x144] sm:$0xff]
      %v276 = vld [vmem:[%s212 + $0x14c] sm:$0xf]
      %v277 = vld [vmem:[%s212 + $0x150] sm:$0xff]
      %v278 = vld [vmem:[%s212 + $0x158] sm:$0xff]
      %v279 = vld [vmem:[%s212 + $0x160] sm:$0xff]
      %v280 = vld [vmem:[%s212 + $0x168] sm:$0xf]
      %v281 = vld [vmem:[%s212 + $0x16c] sm:$0xff]
      %v282 = vld [vmem:[%s212 + $0x174] sm:$0xff]
      %v283 = vld [vmem:[%s212 + $0x17c] sm:$0xff]
      %v284 = vld [vmem:[%s212 + $0x184] sm:$0xf]
      %v285 = vld [vmem:[%s212 + $0x188] sm:$0xff]
      %v286 = vld [vmem:[%s212 + $0x190] sm:$0xff]
      %v287 = vld [vmem:[%s212 + $0x198] sm:$0xff]
      %v288 = vld [vmem:[%s212 + $0x1a0] sm:$0xf]
      %v289 = vld [vmem:[%s212 + $0x1a4] sm:$0xff]
      %v290 = vld [vmem:[%s212 + $0x1ac] sm:$0xff]
      %v291 = vld [vmem:[%s212 + $0x1b4] sm:$0xff]
      %v292 = vld [vmem:[%s212 + $0x1bc] sm:$0xf]
      %v293 = vld [vmem:[%s2] sm:$0xf]
      %v294 = vld [vmem:[%s2 + $0x4] sm:$0xf]
      %v295 = vld [vmem:[%s2 + $0x8] sm:$0xf]
      %v296 = vld [vmem:[%s2 + $0xc] sm:$0xf]
      %v297 = vld [vmem:[%s2 + $0x10] sm:$0xf]
      %v298 = vld [vmem:[%s2 + $0x14] sm:$0xf]
      %v299 = vld [vmem:[%s2 + $0x18] sm:$0xf]
      %v300 = vld [vmem:[%s2 + $0x1c] sm:$0xf]
      %v301 = vld [vmem:[%s2 + $0x20] sm:$0xf]
      %v302 = vld [vmem:[%s2 + $0x24] sm:$0xf]
      %v303 = vld [vmem:[%s2 + $0x28] sm:$0xf]
      %v304 = vld [vmem:[%s2 + $0x2c] sm:$0xf]
      %v305 = vld [vmem:[%s2 + $0x30] sm:$0xf]
      %v306 = vld [vmem:[%s2 + $0x34] sm:$0xf]
      %v307 = vld [vmem:[%s2 + $0x38] sm:$0xf]
      %v308 = vld [vmem:[%s2 + $0x3c] sm:$0xf]
      %v309 = vld [vmem:[%s2 + $0x40] sm:$0xf]
      %v310 = vld [vmem:[%s2 + $0x44] sm:$0xf]
      %v311 = vld [vmem:[%s2 + $0x48] sm:$0xf]
      %v312 = vld [vmem:[%s2 + $0x4c] sm:$0xf]
      %v313 = vld [vmem:[%s2 + $0x50] sm:$0xf]
      %v314 = vld [vmem:[%s2 + $0x54] sm:$0xf]
      %v315 = vld [vmem:[%s2 + $0x58] sm:$0xf]
      %v316 = vld [vmem:[%s2 + $0x5c] sm:$0xf]
      %v317 = vld [vmem:[%s2 + $0x60] sm:$0xf]
      %v318 = vld [vmem:[%s2 + $0x64] sm:$0xf]
      %v319 = vld [vmem:[%s2 + $0x68] sm:$0xf]
      %v320 = vld [vmem:[%s2 + $0x6c] sm:$0xf]
      %v321 = vld [vmem:[%s2 + $0x70] sm:$0xf]
      %v322 = vld [vmem:[%s2 + $0x74] sm:$0xf]
      %v323 = vld [vmem:[%s2 + $0x78] sm:$0xf]
      %v324 = vld [vmem:[%s2 + $0x7c] sm:$0xf]
      %v325 = vld [vmem:[%s2 + $0x80] sm:$0xf]
      %v326 = vld [vmem:[%s2 + $0x84] sm:$0xf]
      %v327 = vld [vmem:[%s2 + $0x88] sm:$0xf]
      %v328 = vld [vmem:[%s2 + $0x8c] sm:$0xf]
      %v329 = vld [vmem:[%s2 + $0x90] sm:$0xf]
      %v330 = vld [vmem:[%s2 + $0x94] sm:$0xf]
      %v331 = vld [vmem:[%s2 + $0x98] sm:$0xf]
      %v332 = vld [vmem:[%s2 + $0x9c] sm:$0xf]
      %v333 = vld [vmem:[%s2 + $0xa0] sm:$0xf]
      %v334 = vld [vmem:[%s2 + $0xa4] sm:$0xf]
      %v335 = vld [vmem:[%s2 + $0xa8] sm:$0xf]
      %v336 = vld [vmem:[%s2 + $0xac] sm:$0xf]
      %v337 = vld [vmem:[%s2 + $0xb0] sm:$0xf]
      %v338 = vld [vmem:[%s2 + $0xb4] sm:$0xf]
      %v339 = vld [vmem:[%s2 + $0xb8] sm:$0xf]
      %v340 = vld [vmem:[%s2 + $0xbc] sm:$0xf]
      %v341 = vld [vmem:[%s2 + $0xc0] sm:$0xf]
      %v342 = vld [vmem:[%s2 + $0xc4] sm:$0xf]
      %v343 = vld [vmem:[%s2 + $0xc8] sm:$0xf]
      %v344 = vld [vmem:[%s2 + $0xcc] sm:$0xf]
      %v345 = vld [vmem:[%s2 + $0xd0] sm:$0xf]
      %v346 = vld [vmem:[%s2 + $0xd4] sm:$0xf]
      %v347 = vld [vmem:[%s2 + $0xd8] sm:$0xf]
      %v348 = vld [vmem:[%s2 + $0xdc] sm:$0xf]
      %v349 = vld [vmem:[%s2 + $0xe0] sm:$0xf]
      %v350 = vld [vmem:[%s2 + $0xe4] sm:$0xf]
      %v351 = vld [vmem:[%s2 + $0xe8] sm:$0xf]
      %v352 = vld [vmem:[%s2 + $0xec] sm:$0xf]
      %v353 = vld [vmem:[%s2 + $0xf0] sm:$0xf]
      %v354 = vld [vmem:[%s2 + $0xf4] sm:$0xf]
      %v355 = vld [vmem:[%s2 + $0xf8] sm:$0xf]
      %v356 = vld [vmem:[%s2 + $0xfc] sm:$0xf]
      %v357 = vld [vmem:[%s2 + $0x100] sm:$0xf]
      %v358 = vld [vmem:[%s2 + $0x104] sm:$0xf]
      %v359 = vld [vmem:[%s2 + $0x108] sm:$0xf]
      %v360 = vld [vmem:[%s2 + $0x10c] sm:$0xf]
      %v361 = vld [vmem:[%s2 + $0x110] sm:$0xf]
      %v362 = vld [vmem:[%s2 + $0x114] sm:$0xf]
      %v363 = vld [vmem:[%s2 + $0x118] sm:$0xf]
      %v364 = vld [vmem:[%s2 + $0x11c] sm:$0xf]
      %v365 = vld [vmem:[%s2 + $0x120] sm:$0xf]
      %v366 = vld [vmem:[%s2 + $0x124] sm:$0xf]
      %v367 = vld [vmem:[%s2 + $0x128] sm:$0xf]
      %v368 = vld [vmem:[%s2 + $0x12c] sm:$0xf]
      %v369 = vld [vmem:[%s2 + $0x130] sm:$0xf]
      %v370 = vld [vmem:[%s2 + $0x134] sm:$0xf]
      %v371 = vld [vmem:[%s2 + $0x138] sm:$0xf]
      %v372 = vld [vmem:[%s2 + $0x13c] sm:$0xf]
      %v373 = vld [vmem:[%s2 + $0x140] sm:$0xf]
      %v374 = vld [vmem:[%s2 + $0x144] sm:$0xf]
      %v375 = vld [vmem:[%s2 + $0x148] sm:$0xf]
      %v376 = vld [vmem:[%s2 + $0x14c] sm:$0xf]
      %v377 = vld [vmem:[%s2 + $0x150] sm:$0xf]
      %v378 = vld [vmem:[%s2 + $0x154] sm:$0xf]
      %v379 = vld [vmem:[%s2 + $0x158] sm:$0xf]
      %v380 = vld [vmem:[%s2 + $0x15c] sm:$0xf]
      %v381 = vld [vmem:[%s2 + $0x160] sm:$0xf]
      %v382 = vld [vmem:[%s2 + $0x164] sm:$0xf]
      %v383 = vld [vmem:[%s2 + $0x168] sm:$0xf]
      %v384 = vld [vmem:[%s2 + $0x16c] sm:$0xf]
      %v385 = vld [vmem:[%s2 + $0x170] sm:$0xf]
      %v386 = vld [vmem:[%s2 + $0x174] sm:$0xf]
      %v387 = vld [vmem:[%s2 + $0x178] sm:$0xf]
      %v388 = vld [vmem:[%s2 + $0x17c] sm:$0xf]
      %v389 = vld [vmem:[%s2 + $0x180] sm:$0xf]
      %v390 = vld [vmem:[%s2 + $0x184] sm:$0xf]
      %v391 = vld [vmem:[%s2 + $0x188] sm:$0xf]
      %v392 = vld [vmem:[%s2 + $0x18c] sm:$0xf]
      %v393 = vld [vmem:[%s3] sm:$0x1]
      %v394 = vlaneseq
      %v395 = vshrl.u32 %v394, 7
      %v396 = vsub.s32 0, %v395
      %v397 = vrot.slane %v393, %v396
      %v462 = vunpack.c.l.b16 %v229
      %v463 = vunpack.c.h.b16 %v229
      %v464 = vunpack.c.l.b16 %v230
      %v465 = vunpack.c.h.b16 %v230
      %v466 = vunpack.c.l.b16 %v231
      %v467 = vunpack.c.h.b16 %v231
      %v468 = vunpack.c.l.b16 %v232
      %v469 = vunpack.c.l.b16 %v233
      %v470 = vunpack.c.h.b16 %v233
      %v471 = vunpack.c.l.b16 %v234
      %v472 = vunpack.c.h.b16 %v234
      %v473 = vunpack.c.l.b16 %v235
      %v474 = vunpack.c.h.b16 %v235
      %v475 = vunpack.c.l.b16 %v236
      %v476 = vunpack.c.l.b16 %v237
      %v477 = vunpack.c.h.b16 %v237
      %v478 = vunpack.c.l.b16 %v238
      %v479 = vunpack.c.h.b16 %v238
      %v480 = vunpack.c.l.b16 %v239
      %v481 = vunpack.c.h.b16 %v239
      %v482 = vunpack.c.l.b16 %v240
      %v483 = vunpack.c.l.b16 %v241
      %v484 = vunpack.c.h.b16 %v241
      %v485 = vunpack.c.l.b16 %v242
      %v486 = vunpack.c.h.b16 %v242
      %v487 = vunpack.c.l.b16 %v243
      %v488 = vunpack.c.h.b16 %v243
      %v489 = vunpack.c.l.b16 %v244
      %v490 = vunpack.c.l.b16 %v245
      %v491 = vunpack.c.h.b16 %v245
      %v492 = vunpack.c.l.b16 %v246
      %v493 = vunpack.c.h.b16 %v246
      %v494 = vunpack.c.l.b16 %v247
      %v495 = vunpack.c.h.b16 %v247
      %v496 = vunpack.c.l.b16 %v248
      %v497 = vunpack.c.l.b16 %v249
      %v498 = vunpack.c.h.b16 %v249
      %v499 = vunpack.c.l.b16 %v250
      %v500 = vunpack.c.h.b16 %v250
      %v501 = vunpack.c.l.b16 %v251
      %v502 = vunpack.c.h.b16 %v251
      %v503 = vunpack.c.l.b16 %v252
      %v504 = vunpack.c.l.b16 %v253
      %v505 = vunpack.c.h.b16 %v253
      %v506 = vunpack.c.l.b16 %v254
      %v507 = vunpack.c.h.b16 %v254
      %v508 = vunpack.c.l.b16 %v255
      %v509 = vunpack.c.h.b16 %v255
      %v510 = vunpack.c.l.b16 %v256
      %v511 = vunpack.c.l.b16 %v257
      %v512 = vunpack.c.h.b16 %v257
      %v513 = vunpack.c.l.b16 %v258
      %v514 = vunpack.c.h.b16 %v258
      %v515 = vunpack.c.l.b16 %v259
      %v516 = vunpack.c.h.b16 %v259
      %v517 = vunpack.c.l.b16 %v260
      %v518 = vunpack.c.l.b16 %v261
      %v519 = vunpack.c.h.b16 %v261
      %v520 = vunpack.c.l.b16 %v262
      %v521 = vunpack.c.h.b16 %v262
      %v522 = vunpack.c.l.b16 %v263
      %v523 = vunpack.c.h.b16 %v263
      %v524 = vunpack.c.l.b16 %v264
      %v525 = vunpack.c.l.b16 %v265
      %v526 = vunpack.c.h.b16 %v265
      %v527 = vunpack.c.l.b16 %v266
      %v528 = vunpack.c.h.b16 %v266
      %v529 = vunpack.c.l.b16 %v267
      %v530 = vunpack.c.h.b16 %v267
      %v531 = vunpack.c.l.b16 %v268
      %v532 = vunpack.c.l.b16 %v269
      %v533 = vunpack.c.h.b16 %v269
      %v534 = vunpack.c.l.b16 %v270
      %v535 = vunpack.c.h.b16 %v270
      %v536 = vunpack.c.l.b16 %v271
      %v537 = vunpack.c.h.b16 %v271
      %v538 = vunpack.c.l.b16 %v272
      %v539 = vunpack.c.l.b16 %v273
      %v540 = vunpack.c.h.b16 %v273
      %v541 = vunpack.c.l.b16 %v274
      %v542 = vunpack.c.h.b16 %v274
      %v543 = vunpack.c.l.b16 %v275
      %v544 = vunpack.c.h.b16 %v275
      %v545 = vunpack.c.l.b16 %v276
      %v546 = vunpack.c.l.b16 %v277
      %v547 = vunpack.c.h.b16 %v277
      %v548 = vunpack.c.l.b16 %v278
      %v549 = vunpack.c.h.b16 %v278
      %v550 = vunpack.c.l.b16 %v279
      %v551 = vunpack.c.h.b16 %v279
      %v552 = vunpack.c.l.b16 %v280
      %v553 = vunpack.c.l.b16 %v281
      %v554 = vunpack.c.h.b16 %v281
      %v555 = vunpack.c.l.b16 %v282
      %v556 = vunpack.c.h.b16 %v282
      %v557 = vunpack.c.l.b16 %v283
      %v558 = vunpack.c.h.b16 %v283
      %v559 = vunpack.c.l.b16 %v284
      %v560 = vunpack.c.l.b16 %v285
      %v561 = vunpack.c.h.b16 %v285
      %v562 = vunpack.c.l.b16 %v286
      %v563 = vunpack.c.h.b16 %v286
      %v564 = vunpack.c.l.b16 %v287
      %v565 = vunpack.c.h.b16 %v287
      %v566 = vunpack.c.l.b16 %v288
      %v567 = vunpack.c.l.b16 %v289
      %v568 = vunpack.c.h.b16 %v289
      %v569 = vunpack.c.l.b16 %v290
      %v570 = vunpack.c.h.b16 %v290
      %v571 = vunpack.c.l.b16 %v291
      %v572 = vunpack.c.h.b16 %v291
      %v573 = vunpack.c.l.b16 %v292
      %v574 = vpack.c.b16 %v469, %v462
      %v575 = vpack.c.b16 %v470, %v463
      %v576 = vpack.c.b16 %v471, %v464
      %v577 = vpack.c.b16 %v472, %v465
      %v578 = vpack.c.b16 %v473, %v466
      %v579 = vpack.c.b16 %v474, %v467
      %v580 = vpack.c.b16 %v475, %v468
      %v581 = vpack.c.b16 %v483, %v476
      %v582 = vpack.c.b16 %v484, %v477
      %v583 = vpack.c.b16 %v485, %v478
      %v584 = vpack.c.b16 %v486, %v479
      %v585 = vpack.c.b16 %v487, %v480
      %v586 = vpack.c.b16 %v488, %v481
      %v587 = vpack.c.b16 %v489, %v482
      %v588 = vpack.c.b16 %v497, %v490
      %v589 = vpack.c.b16 %v498, %v491
      %v590 = vpack.c.b16 %v499, %v492
      %v591 = vpack.c.b16 %v500, %v493
      %v592 = vpack.c.b16 %v501, %v494
      %v593 = vpack.c.b16 %v502, %v495
      %v594 = vpack.c.b16 %v503, %v496
      %v595 = vpack.c.b16 %v511, %v504
      %v596 = vpack.c.b16 %v512, %v505
      %v597 = vpack.c.b16 %v513, %v506
      %v598 = vpack.c.b16 %v514, %v507
      %v599 = vpack.c.b16 %v515, %v508
      %v600 = vpack.c.b16 %v516, %v509
      %v601 = vpack.c.b16 %v517, %v510
      %v602 = vpack.c.b16 %v525, %v518
      %v603 = vpack.c.b16 %v526, %v519
      %v604 = vpack.c.b16 %v527, %v520
      %v605 = vpack.c.b16 %v528, %v521
      %v606 = vpack.c.b16 %v529, %v522
      %v607 = vpack.c.b16 %v530, %v523
      %v608 = vpack.c.b16 %v531, %v524
      %v609 = vpack.c.b16 %v539, %v532
      %v610 = vpack.c.b16 %v540, %v533
      %v611 = vpack.c.b16 %v541, %v534
      %v612 = vpack.c.b16 %v542, %v535
      %v613 = vpack.c.b16 %v543, %v536
      %v614 = vpack.c.b16 %v544, %v537
      %v615 = vpack.c.b16 %v545, %v538
      %v616 = vpack.c.b16 %v553, %v546
      %v617 = vpack.c.b16 %v554, %v547
      %v618 = vpack.c.b16 %v555, %v548
      %v619 = vpack.c.b16 %v556, %v549
      %v620 = vpack.c.b16 %v557, %v550
      %v621 = vpack.c.b16 %v558, %v551
      %v622 = vpack.c.b16 %v559, %v552
      %v623 = vpack.c.b16 %v567, %v560
      %v624 = vpack.c.b16 %v568, %v561
      %v625 = vpack.c.b16 %v569, %v562
      %v626 = vpack.c.b16 %v570, %v563
      %v627 = vpack.c.b16 %v571, %v564
      %v628 = vpack.c.b16 %v572, %v565
      %v629 = vpack.c.b16 %v573, %v566
      %v778 = vunpack.c.l.b16 %v293
      %v779 = vunpack.c.l.b16 %v294
      %v780 = vunpack.c.l.b16 %v295
      %v781 = vunpack.c.l.b16 %v296
      %v782 = vunpack.c.l.b16 %v297
      %v783 = vunpack.c.l.b16 %v298
      %v784 = vunpack.c.l.b16 %v299
      %v785 = vunpack.c.l.b16 %v300
      %v786 = vunpack.c.l.b16 %v301
      %v787 = vunpack.c.l.b16 %v302
      %v788 = vunpack.c.l.b16 %v303
      %v789 = vunpack.c.l.b16 %v304
      %v790 = vunpack.c.l.b16 %v305
      %v791 = vunpack.c.l.b16 %v306
      %v792 = vunpack.c.l.b16 %v307
      %v793 = vunpack.c.l.b16 %v308
      %v794 = vunpack.c.l.b16 %v309
      %v795 = vunpack.c.l.b16 %v310
      %v796 = vunpack.c.l.b16 %v311
      %v797 = vunpack.c.l.b16 %v312
      %v798 = vunpack.c.l.b16 %v313
      %v799 = vunpack.c.l.b16 %v314
      %v800 = vunpack.c.l.b16 %v315
      %v801 = vunpack.c.l.b16 %v316
      %v802 = vunpack.c.l.b16 %v317
      %v803 = vunpack.c.l.b16 %v318
      %v804 = vunpack.c.l.b16 %v319
      %v805 = vunpack.c.l.b16 %v320
      %v806 = vunpack.c.l.b16 %v321
      %v807 = vunpack.c.l.b16 %v322
      %v808 = vunpack.c.l.b16 %v323
      %v809 = vunpack.c.l.b16 %v324
      %v810 = vunpack.c.l.b16 %v325
      %v811 = vunpack.c.l.b16 %v326
      %v812 = vunpack.c.l.b16 %v327
      %v813 = vunpack.c.l.b16 %v328
      %v814 = vunpack.c.l.b16 %v329
      %v815 = vunpack.c.l.b16 %v330
      %v816 = vunpack.c.l.b16 %v331
      %v817 = vunpack.c.l.b16 %v332
      %v818 = vunpack.c.l.b16 %v333
      %v819 = vunpack.c.l.b16 %v334
      %v820 = vunpack.c.l.b16 %v335
      %v821 = vunpack.c.l.b16 %v336
      %v822 = vunpack.c.l.b16 %v337
      %v823 = vunpack.c.l.b16 %v338
      %v824 = vunpack.c.l.b16 %v339
      %v825 = vunpack.c.l.b16 %v340
      %v826 = vunpack.c.l.b16 %v341
      %v827 = vunpack.c.l.b16 %v342
      %v828 = vunpack.c.l.b16 %v343
      %v829 = vunpack.c.l.b16 %v344
      %v830 = vunpack.c.l.b16 %v345
      %v831 = vunpack.c.l.b16 %v346
      %v832 = vunpack.c.l.b16 %v347
      %v833 = vunpack.c.l.b16 %v348
      %v834 = vunpack.c.l.b16 %v349
      %v835 = vunpack.c.l.b16 %v350
      %v836 = vunpack.c.l.b16 %v351
      %v837 = vunpack.c.l.b16 %v352
      %v838 = vunpack.c.l.b16 %v353
      %v839 = vunpack.c.l.b16 %v354
      %v840 = vunpack.c.l.b16 %v355
      %v841 = vunpack.c.l.b16 %v356
      %v842 = vunpack.c.l.b16 %v357
      %v843 = vunpack.c.l.b16 %v358
      %v844 = vunpack.c.l.b16 %v359
      %v845 = vunpack.c.l.b16 %v360
      %v846 = vunpack.c.l.b16 %v361
      %v847 = vunpack.c.l.b16 %v362
      %v848 = vunpack.c.l.b16 %v363
      %v849 = vunpack.c.l.b16 %v364
      %v850 = vunpack.c.l.b16 %v365
      %v851 = vunpack.c.l.b16 %v366
      %v852 = vunpack.c.l.b16 %v367
      %v853 = vunpack.c.l.b16 %v368
      %v854 = vunpack.c.l.b16 %v369
      %v855 = vunpack.c.l.b16 %v370
      %v856 = vunpack.c.l.b16 %v371
      %v857 = vunpack.c.l.b16 %v372
      %v858 = vunpack.c.l.b16 %v373
      %v859 = vunpack.c.l.b16 %v374
      %v860 = vunpack.c.l.b16 %v375
      %v861 = vunpack.c.l.b16 %v376
      %v862 = vunpack.c.l.b16 %v377
      %v863 = vunpack.c.l.b16 %v378
      %v864 = vunpack.c.l.b16 %v379
      %v865 = vunpack.c.l.b16 %v380
      %v866 = vunpack.c.l.b16 %v381
      %v867 = vunpack.c.l.b16 %v382
      %v868 = vunpack.c.l.b16 %v383
      %v869 = vunpack.c.l.b16 %v384
      %v870 = vunpack.c.l.b16 %v385
      %v871 = vunpack.c.l.b16 %v386
      %v872 = vunpack.c.l.b16 %v387
      %v873 = vunpack.c.l.b16 %v388
      %v874 = vunpack.c.l.b16 %v389
      %v875 = vunpack.c.l.b16 %v390
      %v876 = vunpack.c.l.b16 %v391
      %v877 = vunpack.c.l.b16 %v392
      %v878 = vpack.c.b16 %v779, %v778
      %v879 = vpack.c.b16 %v781, %v780
      %v880 = vpack.c.b16 %v783, %v782
      %v881 = vpack.c.b16 %v785, %v784
      %v882 = vpack.c.b16 %v787, %v786
      %v883 = vpack.c.b16 %v789, %v788
      %v884 = vpack.c.b16 %v791, %v790
      %v885 = vpack.c.b16 %v793, %v792
      %v886 = vpack.c.b16 %v795, %v794
      %v887 = vpack.c.b16 %v797, %v796
      %v888 = vpack.c.b16 %v799, %v798
      %v889 = vpack.c.b16 %v801, %v800
      %v890 = vpack.c.b16 %v803, %v802
      %v891 = vpack.c.b16 %v805, %v804
      %v892 = vpack.c.b16 %v807, %v806
      %v893 = vpack.c.b16 %v809, %v808
      %v894 = vpack.c.b16 %v811, %v810
      %v895 = vpack.c.b16 %v813, %v812
      %v896 = vpack.c.b16 %v815, %v814
      %v897 = vpack.c.b16 %v817, %v816
      %v898 = vpack.c.b16 %v819, %v818
      %v899 = vpack.c.b16 %v821, %v820
      %v900 = vpack.c.b16 %v823, %v822
      %v901 = vpack.c.b16 %v825, %v824
      %v902 = vpack.c.b16 %v827, %v826
      %v903 = vpack.c.b16 %v829, %v828
      %v904 = vpack.c.b16 %v831, %v830
      %v905 = vpack.c.b16 %v833, %v832
      %v906 = vpack.c.b16 %v835, %v834
      %v907 = vpack.c.b16 %v837, %v836
      %v908 = vpack.c.b16 %v839, %v838
      %v909 = vpack.c.b16 %v841, %v840
      %v910 = vpack.c.b16 %v843, %v842
      %v911 = vpack.c.b16 %v845, %v844
      %v912 = vpack.c.b16 %v847, %v846
      %v913 = vpack.c.b16 %v849, %v848
      %v914 = vpack.c.b16 %v851, %v850
      %v915 = vpack.c.b16 %v853, %v852
      %v916 = vpack.c.b16 %v855, %v854
      %v917 = vpack.c.b16 %v857, %v856
      %v918 = vpack.c.b16 %v859, %v858
      %v919 = vpack.c.b16 %v861, %v860
      %v920 = vpack.c.b16 %v863, %v862
      %v921 = vpack.c.b16 %v865, %v864
      %v922 = vpack.c.b16 %v867, %v866
      %v923 = vpack.c.b16 %v869, %v868
      %v924 = vpack.c.b16 %v871, %v870
      %v925 = vpack.c.b16 %v873, %v872
      %v926 = vpack.c.b16 %v875, %v874
      %v927 = vpack.c.b16 %v877, %v876
      %vm978 = vcmask 261120
      %v980 = vsel %vm978, %v580, 0
      %v983 = vsel %vm978, %v587, 0
      %v986 = vsel %vm978, %v594, 0
      %v989 = vsel %vm978, %v601, 0
      %v992 = vsel %vm978, %v608, 0
      %v995 = vsel %vm978, %v615, 0
      %v998 = vsel %vm978, %v622, 0
      %v1001 = vsel %vm978, %v629, 0
      %1003 = vmatprep.subr.bf16.mxu0 0
      %1004 = vmatpush1.bf16.msra.mxu0 %v885
      %1005 = vmatprep.subr.bf16.mxu0 0
      %1006 = vmatpush1.bf16.msra.mxu0 %v884
      %1007 = vmatprep.subr.bf16.mxu0 0
      %1008 = vmatpush1.bf16.msra.mxu0 %v883
      %1009 = vmatprep.subr.bf16.mxu0 0
      %1010 = vmatpush1.bf16.msra.mxu0 %v882
      %1011 = vmatprep.subr.bf16.mxu0 0
      %1012 = vmatpush1.bf16.msra.mxu0 %v881
      %1013 = vmatprep.subr.bf16.mxu0 0
      %1014 = vmatpush1.bf16.msra.mxu0 %v880
      %1015 = vmatprep.subr.bf16.mxu0 0
      %1016 = vmatpush1.bf16.msra.mxu0 %v879
      %1017 = vmatprep.subr.bf16.mxu0 0
      %1018 = vmatpush1.bf16.msra.mxu0 %v878
      %1019 = vmatprep.subr.bf16.mxu0 0
      %1020 = vmatpush2.bf16.msra.mxu0 %v893
      %1021 = vmatprep.subr.bf16.mxu0 0
      %1022 = vmatpush2.bf16.msra.mxu0 %v892
      %1023 = vmatprep.subr.bf16.mxu0 0
      %1024 = vmatpush2.bf16.msra.mxu0 %v891
      %1025 = vmatprep.subr.bf16.mxu0 0
      %1026 = vmatpush2.bf16.msra.mxu0 %v890
      %1027 = vmatprep.subr.bf16.mxu0 0
      %1028 = vmatpush2.bf16.msra.mxu0 %v889
      %1029 = vmatprep.subr.bf16.mxu0 0
      %1030 = vmatpush2.bf16.msra.mxu0 %v888
      %1031 = vmatprep.subr.bf16.mxu0 0
      %1032 = vmatpush2.bf16.msra.mxu0 %v887
      %1033 = vmatprep.subr.bf16.mxu0 0
      %1034 = vmatpush2.bf16.msra.mxu0 %v886
      %1035 = vmatprep.mubr.bf16.mxu0 %v575
      %1036 = vmatmul.mubr.bf16.gmra.mxu0 %v574
      %v1037 = vpop.f32.mrf.mxu0
      %v1038 = vadd.f32 %v397, %v1037
      %v1039 = vpop.f32.mrf.mxu0
      %v1040 = vpop.f32.mrf.mxu0
      %v1041 = vadd.f32 %v397, %v1040
      %v1042 = vpop.f32.mrf.mxu0
      %1043 = vmatprep.mubr.bf16.mxu0 %v582
      %1044 = vmatmul.mubr.bf16.gmra.mxu0 %v581
      %v1045 = vpop.f32.mrf.mxu0
      %v1046 = vadd.f32 %v397, %v1045
      %v1047 = vpop.f32.mrf.mxu0
      %v1048 = vpop.f32.mrf.mxu0
      %v1049 = vadd.f32 %v397, %v1048
      %v1050 = vpop.f32.mrf.mxu0
      %1051 = vmatprep.mubr.bf16.mxu0 %v589
      %1052 = vmatmul.mubr.bf16.gmra.mxu0 %v588
      %v1053 = vpop.f32.mrf.mxu0
      %v1054 = vadd.f32 %v397, %v1053
      %v1055 = vpop.f32.mrf.mxu0
      %v1056 = vpop.f32.mrf.mxu0
      %v1057 = vadd.f32 %v397, %v1056
      %v1058 = vpop.f32.mrf.mxu0
      %1059 = vmatprep.mubr.bf16.mxu0 %v596
      %1060 = vmatmul.mubr.bf16.gmra.mxu0 %v595
      %v1061 = vpop.f32.mrf.mxu0
      %v1062 = vadd.f32 %v397, %v1061
      %v1063 = vpop.f32.mrf.mxu0
      %v1064 = vpop.f32.mrf.mxu0
      %v1065 = vadd.f32 %v397, %v1064
      %v1066 = vpop.f32.mrf.mxu0
      %1067 = vmatprep.mubr.bf16.mxu0 %v603
      %1068 = vmatmul.mubr.bf16.gmra.mxu0 %v602
      %v1069 = vpop.f32.mrf.mxu0
      %v1070 = vadd.f32 %v397, %v1069
      %v1071 = vpop.f32.mrf.mxu0
      %v1072 = vpop.f32.mrf.mxu0
      %v1073 = vadd.f32 %v397, %v1072
      %v1074 = vpop.f32.mrf.mxu0
      %1075 = vmatprep.mubr.bf16.mxu0 %v610
      %1076 = vmatmul.mubr.bf16.gmra.mxu0 %v609
      %v1077 = vpop.f32.mrf.mxu0
      %v1078 = vadd.f32 %v397, %v1077
      %v1079 = vpop.f32.mrf.mxu0
      %v1080 = vpop.f32.mrf.mxu0
      %v1081 = vadd.f32 %v397, %v1080
      %v1082 = vpop.f32.mrf.mxu0
      %1083 = vmatprep.mubr.bf16.mxu0 %v617
      %1084 = vmatmul.mubr.bf16.gmra.mxu0 %v616
      %v1085 = vpop.f32.mrf.mxu0
      %v1086 = vadd.f32 %v397, %v1085
      %v1087 = vpop.f32.mrf.mxu0
      %v1088 = vpop.f32.mrf.mxu0
      %v1089 = vadd.f32 %v397, %v1088
      %v1090 = vpop.f32.mrf.mxu0
      %1091 = vmatprep.mubr.bf16.mxu0 %v624
      %1092 = vmatmul.mubr.bf16.gmra.mxu0 %v623
      %v1093 = vpop.f32.mrf.mxu0
      %v1094 = vadd.f32 %v397, %v1093
      %v1095 = vpop.f32.mrf.mxu0
      %v1096 = vpop.f32.mrf.mxu0
      %v1097 = vadd.f32 %v397, %v1096
      %v1098 = vpop.f32.mrf.mxu0
      %1099 = vdwg.mxu0
      %1100 = vmatprep.subr.bf16.mxu0 0
      %1101 = vmatpush1.bf16.msra.mxu0 %v901
      %1102 = vmatprep.subr.bf16.mxu0 0
      %1103 = vmatpush1.bf16.msra.mxu0 %v900
      %1104 = vmatprep.subr.bf16.mxu0 0
      %1105 = vmatpush1.bf16.msra.mxu0 %v899
      %1106 = vmatprep.subr.bf16.mxu0 0
      %1107 = vmatpush1.bf16.msra.mxu0 %v898
      %1108 = vmatprep.subr.bf16.mxu0 0
      %1109 = vmatpush1.bf16.msra.mxu0 %v897
      %1110 = vmatprep.subr.bf16.mxu0 0
      %1111 = vmatpush1.bf16.msra.mxu0 %v896
      %1112 = vmatprep.subr.bf16.mxu0 0
      %1113 = vmatpush1.bf16.msra.mxu0 %v895
      %1114 = vmatprep.subr.bf16.mxu0 0
      %1115 = vmatpush1.bf16.msra.mxu0 %v894
      %1116 = vmatprep.subr.bf16.mxu0 0
      %1117 = vmatpush2.bf16.msra.mxu0 %v909
      %1118 = vmatprep.subr.bf16.mxu0 0
      %1119 = vmatpush2.bf16.msra.mxu0 %v908
      %1120 = vmatprep.subr.bf16.mxu0 0
      %1121 = vmatpush2.bf16.msra.mxu0 %v907
      %1122 = vmatprep.subr.bf16.mxu0 0
      %1123 = vmatpush2.bf16.msra.mxu0 %v906
      %1124 = vmatprep.subr.bf16.mxu0 0
      %1125 = vmatpush2.bf16.msra.mxu0 %v905
      %1126 = vmatprep.subr.bf16.mxu0 0
      %1127 = vmatpush2.bf16.msra.mxu0 %v904
      %1128 = vmatprep.subr.bf16.mxu0 0
      %1129 = vmatpush2.bf16.msra.mxu0 %v903
      %1130 = vmatprep.subr.bf16.mxu0 0
      %1131 = vmatpush2.bf16.msra.mxu0 %v902
      %1132 = vmatprep.mubr.bf16.mxu0 %v577
      %1133 = vmatmul.mubr.bf16.gmra.mxu0 %v576
      %v1134 = vpop.f32.mrf.mxu0
      %v1135 = vadd.f32 %v1038, %v1134
      %v1136 = vpop.f32.mrf.mxu0
      %v1137 = vpop.f32.mrf.mxu0
      %v1138 = vadd.f32 %v1041, %v1137
      %v1139 = vpop.f32.mrf.mxu0
      %1140 = vmatprep.mubr.bf16.mxu0 %v584
      %1141 = vmatmul.mubr.bf16.gmra.mxu0 %v583
      %v1142 = vpop.f32.mrf.mxu0
      %v1143 = vadd.f32 %v1046, %v1142
      %v1144 = vpop.f32.mrf.mxu0
      %v1145 = vpop.f32.mrf.mxu0
      %v1146 = vadd.f32 %v1049, %v1145
      %v1147 = vpop.f32.mrf.mxu0
      %1148 = vmatprep.mubr.bf16.mxu0 %v591
      %1149 = vmatmul.mubr.bf16.gmra.mxu0 %v590
      %v1150 = vpop.f32.mrf.mxu0
      %v1151 = vadd.f32 %v1054, %v1150
      %v1152 = vpop.f32.mrf.mxu0
      %v1153 = vpop.f32.mrf.mxu0
      %v1154 = vadd.f32 %v1057, %v1153
      %v1155 = vpop.f32.mrf.mxu0
      %1156 = vmatprep.mubr.bf16.mxu0 %v598
      %1157 = vmatmul.mubr.bf16.gmra.mxu0 %v597
      %v1158 = vpop.f32.mrf.mxu0
      %v1159 = vadd.f32 %v1062, %v1158
      %v1160 = vpop.f32.mrf.mxu0
      %v1161 = vpop.f32.mrf.mxu0
      %v1162 = vadd.f32 %v1065, %v1161
      %v1163 = vpop.f32.mrf.mxu0
      %1164 = vmatprep.mubr.bf16.mxu0 %v605
      %1165 = vmatmul.mubr.bf16.gmra.mxu0 %v604
      %v1166 = vpop.f32.mrf.mxu0
      %v1167 = vadd.f32 %v1070, %v1166
      %v1168 = vpop.f32.mrf.mxu0
      %v1169 = vpop.f32.mrf.mxu0
      %v1170 = vadd.f32 %v1073, %v1169
      %v1171 = vpop.f32.mrf.mxu0
      %1172 = vmatprep.mubr.bf16.mxu0 %v612
      %1173 = vmatmul.mubr.bf16.gmra.mxu0 %v611
      %v1174 = vpop.f32.mrf.mxu0
      %v1175 = vadd.f32 %v1078, %v1174
      %v1176 = vpop.f32.mrf.mxu0
      %v1177 = vpop.f32.mrf.mxu0
      %v1178 = vadd.f32 %v1081, %v1177
      %v1179 = vpop.f32.mrf.mxu0
      %1180 = vmatprep.mubr.bf16.mxu0 %v619
      %1181 = vmatmul.mubr.bf16.gmra.mxu0 %v618
      %v1182 = vpop.f32.mrf.mxu0
      %v1183 = vadd.f32 %v1086, %v1182
      %v1184 = vpop.f32.mrf.mxu0
      %v1185 = vpop.f32.mrf.mxu0
      %v1186 = vadd.f32 %v1089, %v1185
      %v1187 = vpop.f32.mrf.mxu0
      %1188 = vmatprep.mubr.bf16.mxu0 %v626
      %1189 = vmatmul.mubr.bf16.gmra.mxu0 %v625
      %v1190 = vpop.f32.mrf.mxu0
      %v1191 = vadd.f32 %v1094, %v1190
      %v1192 = vpop.f32.mrf.mxu0
      %v1193 = vpop.f32.mrf.mxu0
      %v1194 = vadd.f32 %v1097, %v1193
      %v1195 = vpop.f32.mrf.mxu0
      %1196 = vdwg.mxu0
      %1197 = vmatprep.subr.bf16.mxu0 0
      %1198 = vmatpush1.bf16.msra.mxu0 %v917
      %1199 = vmatprep.subr.bf16.mxu0 0
      %1200 = vmatpush1.bf16.msra.mxu0 %v916
      %1201 = vmatprep.subr.bf16.mxu0 0
      %1202 = vmatpush1.bf16.msra.mxu0 %v915
      %1203 = vmatprep.subr.bf16.mxu0 0
      %1204 = vmatpush1.bf16.msra.mxu0 %v914
      %1205 = vmatprep.subr.bf16.mxu0 0
      %1206 = vmatpush1.bf16.msra.mxu0 %v913
      %1207 = vmatprep.subr.bf16.mxu0 0
      %1208 = vmatpush1.bf16.msra.mxu0 %v912
      %1209 = vmatprep.subr.bf16.mxu0 0
      %1210 = vmatpush1.bf16.msra.mxu0 %v911
      %1211 = vmatprep.subr.bf16.mxu0 0
      %1212 = vmatpush1.bf16.msra.mxu0 %v910
      %1213 = vmatprep.subr.bf16.mxu0 0
      %1214 = vmatpush2.bf16.msra.mxu0 %v925
      %1215 = vmatprep.subr.bf16.mxu0 0
      %1216 = vmatpush2.bf16.msra.mxu0 %v924
      %1217 = vmatprep.subr.bf16.mxu0 0
      %1218 = vmatpush2.bf16.msra.mxu0 %v923
      %1219 = vmatprep.subr.bf16.mxu0 0
      %1220 = vmatpush2.bf16.msra.mxu0 %v922
      %1221 = vmatprep.subr.bf16.mxu0 0
      %1222 = vmatpush2.bf16.msra.mxu0 %v921
      %1223 = vmatprep.subr.bf16.mxu0 0
      %1224 = vmatpush2.bf16.msra.mxu0 %v920
      %1225 = vmatprep.subr.bf16.mxu0 0
      %1226 = vmatpush2.bf16.msra.mxu0 %v919
      %1227 = vmatprep.subr.bf16.mxu0 0
      %1228 = vmatpush2.bf16.msra.mxu0 %v918
      %1229 = vmatprep.mubr.bf16.mxu0 %v579
      %1230 = vmatmul.mubr.bf16.gmra.mxu0 %v578
      %v1231 = vpop.f32.mrf.mxu0
      %v1232 = vadd.f32 %v1135, %v1231
      %v1233 = vpop.f32.mrf.mxu0
      %v1234 = vpop.f32.mrf.mxu0
      %v1235 = vadd.f32 %v1138, %v1234
      %v1236 = vpop.f32.mrf.mxu0
      %1237 = vmatprep.mubr.bf16.mxu0 %v586
      %1238 = vmatmul.mubr.bf16.gmra.mxu0 %v585
      %v1239 = vpop.f32.mrf.mxu0
      %v1240 = vadd.f32 %v1143, %v1239
      %v1241 = vpop.f32.mrf.mxu0
      %v1242 = vpop.f32.mrf.mxu0
      %v1243 = vadd.f32 %v1146, %v1242
      %v1244 = vpop.f32.mrf.mxu0
      %1245 = vmatprep.mubr.bf16.mxu0 %v593
      %1246 = vmatmul.mubr.bf16.gmra.mxu0 %v592
      %v1247 = vpop.f32.mrf.mxu0
      %v1248 = vadd.f32 %v1151, %v1247
      %v1249 = vpop.f32.mrf.mxu0
      %v1250 = vpop.f32.mrf.mxu0
      %v1251 = vadd.f32 %v1154, %v1250
      %v1252 = vpop.f32.mrf.mxu0
      %1253 = vmatprep.mubr.bf16.mxu0 %v600
      %1254 = vmatmul.mubr.bf16.gmra.mxu0 %v599
      %v1255 = vpop.f32.mrf.mxu0
      %v1256 = vadd.f32 %v1159, %v1255
      %v1257 = vpop.f32.mrf.mxu0
      %v1258 = vpop.f32.mrf.mxu0
      %v1259 = vadd.f32 %v1162, %v1258
      %v1260 = vpop.f32.mrf.mxu0
      %1261 = vmatprep.mubr.bf16.mxu0 %v607
      %1262 = vmatmul.mubr.bf16.gmra.mxu0 %v606
      %v1263 = vpop.f32.mrf.mxu0
      %v1264 = vadd.f32 %v1167, %v1263
      %v1265 = vpop.f32.mrf.mxu0
      %v1266 = vpop.f32.mrf.mxu0
      %v1267 = vadd.f32 %v1170, %v1266
      %v1268 = vpop.f32.mrf.mxu0
      %1269 = vmatprep.mubr.bf16.mxu0 %v614
      %1270 = vmatmul.mubr.bf16.gmra.mxu0 %v613
      %v1271 = vpop.f32.mrf.mxu0
      %v1272 = vadd.f32 %v1175, %v1271
      %v1273 = vpop.f32.mrf.mxu0
      %v1274 = vpop.f32.mrf.mxu0
      %v1275 = vadd.f32 %v1178, %v1274
      %v1276 = vpop.f32.mrf.mxu0
      %1277 = vmatprep.mubr.bf16.mxu0 %v621
      %1278 = vmatmul.mubr.bf16.gmra.mxu0 %v620
      %v1279 = vpop.f32.mrf.mxu0
      %v1280 = vadd.f32 %v1183, %v1279
      %v1281 = vpop.f32.mrf.mxu0
      %v1282 = vpop.f32.mrf.mxu0
      %v1283 = vadd.f32 %v1186, %v1282
      %v1284 = vpop.f32.mrf.mxu0
      %1285 = vmatprep.mubr.bf16.mxu0 %v628
      %1286 = vmatmul.mubr.bf16.gmra.mxu0 %v627
      %v1287 = vpop.f32.mrf.mxu0
      %v1288 = vadd.f32 %v1191, %v1287
      %v1289 = vpop.f32.mrf.mxu0
      %v1290 = vpop.f32.mrf.mxu0
      %v1291 = vadd.f32 %v1194, %v1290
      %v1292 = vpop.f32.mrf.mxu0
      %1293 = vdwg.mxu0
      %1294 = vmatprep.subr.bf16.mxu0 0
      %1295 = vmatpush1.bf16.msra.mxu0 0
      %1296 = vmatprep.subr.bf16.mxu0 0
      %1297 = vmatpush1.bf16.msra.mxu0 0
      %1298 = vmatprep.subr.bf16.mxu0 0
      %1299 = vmatpush1.bf16.msra.mxu0 0
      %1300 = vmatprep.subr.bf16.mxu0 0
      %1301 = vmatpush1.bf16.msra.mxu0 0
      %1302 = vmatprep.subr.bf16.mxu0 0
      %1303 = vmatpush1.bf16.msra.mxu0 0
      %1304 = vmatprep.subr.bf16.mxu0 0
      %1305 = vmatpush1.bf16.msra.mxu0 0
      %1306 = vmatprep.subr.bf16.mxu0 0
      %1307 = vmatpush1.bf16.msra.mxu0 %v927
      %1308 = vmatprep.subr.bf16.mxu0 0
      %1309 = vmatpush1.bf16.msra.mxu0 %v926
      %1310 = vmatprep.subr.bf16.mxu0 0
      %1311 = vmatpush2.bf16.msra.mxu0 0
      %1312 = vmatprep.subr.bf16.mxu0 0
      %1313 = vmatpush2.bf16.msra.mxu0 0
      %1314 = vmatprep.subr.bf16.mxu0 0
      %1315 = vmatpush2.bf16.msra.mxu0 0
      %1316 = vmatprep.subr.bf16.mxu0 0
      %1317 = vmatpush2.bf16.msra.mxu0 0
      %1318 = vmatprep.subr.bf16.mxu0 0
      %1319 = vmatpush2.bf16.msra.mxu0 0
      %1320 = vmatprep.subr.bf16.mxu0 0
      %1321 = vmatpush2.bf16.msra.mxu0 0
      %1322 = vmatprep.subr.bf16.mxu0 0
      %1323 = vmatpush2.bf16.msra.mxu0 0
      %1324 = vmatprep.subr.bf16.mxu0 0
      %1325 = vmatpush2.bf16.msra.mxu0 0
      %1326 = vmatprep.mubr.bf16.mxu0 0
      %1327 = vmatmul.mubr.bf16.gmra.mxu0 %v980
      %v1328 = vpop.f32.mrf.mxu0
      %v1329 = vadd.f32 %v1232, %v1328
      %v1330 = vpop.f32.mrf.mxu0
      %v1331 = vpop.f32.mrf.mxu0
      %v1332 = vadd.f32 %v1235, %v1331
      %v1333 = vpop.f32.mrf.mxu0
      %1334 = vmatprep.mubr.bf16.mxu0 0
      %1335 = vmatmul.mubr.bf16.gmra.mxu0 %v983
      %v1336 = vpop.f32.mrf.mxu0
      %v1337 = vadd.f32 %v1240, %v1336
      %v1338 = vpop.f32.mrf.mxu0
      %v1339 = vpop.f32.mrf.mxu0
      %v1340 = vadd.f32 %v1243, %v1339
      %v1341 = vpop.f32.mrf.mxu0
      %1342 = vmatprep.mubr.bf16.mxu0 0
      %1343 = vmatmul.mubr.bf16.gmra.mxu0 %v986
      %v1344 = vpop.f32.mrf.mxu0
      %v1345 = vadd.f32 %v1248, %v1344
      %v1346 = vpop.f32.mrf.mxu0
      %v1347 = vpop.f32.mrf.mxu0
      %v1348 = vadd.f32 %v1251, %v1347
      %v1349 = vpop.f32.mrf.mxu0
      %1350 = vmatprep.mubr.bf16.mxu0 0
      %1351 = vmatmul.mubr.bf16.gmra.mxu0 %v989
      %v1352 = vpop.f32.mrf.mxu0
      %v1353 = vadd.f32 %v1256, %v1352
      %v1354 = vpop.f32.mrf.mxu0
      %v1355 = vpop.f32.mrf.mxu0
      %v1356 = vadd.f32 %v1259, %v1355
      %v1357 = vpop.f32.mrf.mxu0
      %1358 = vmatprep.mubr.bf16.mxu0 0
      %1359 = vmatmul.mubr.bf16.gmra.mxu0 %v992
      %v1360 = vpop.f32.mrf.mxu0
      %v1361 = vadd.f32 %v1264, %v1360
      %v1362 = vpop.f32.mrf.mxu0
      %v1363 = vpop.f32.mrf.mxu0
      %v1364 = vadd.f32 %v1267, %v1363
      %v1365 = vpop.f32.mrf.mxu0
      %1366 = vmatprep.mubr.bf16.mxu0 0
      %1367 = vmatmul.mubr.bf16.gmra.mxu0 %v995
      %v1368 = vpop.f32.mrf.mxu0
      %v1369 = vadd.f32 %v1272, %v1368
      %v1370 = vpop.f32.mrf.mxu0
      %v1371 = vpop.f32.mrf.mxu0
      %v1372 = vadd.f32 %v1275, %v1371
      %v1373 = vpop.f32.mrf.mxu0
      %1374 = vmatprep.mubr.bf16.mxu0 0
      %1375 = vmatmul.mubr.bf16.gmra.mxu0 %v998
      %v1376 = vpop.f32.mrf.mxu0
      %v1377 = vadd.f32 %v1280, %v1376
      %v1378 = vpop.f32.mrf.mxu0
      %v1379 = vpop.f32.mrf.mxu0
      %v1380 = vadd.f32 %v1283, %v1379
      %v1381 = vpop.f32.mrf.mxu0
      %1382 = vmatprep.mubr.bf16.mxu0 0
      %1383 = vmatmul.mubr.bf16.gmra.mxu0 %v1001
      %v1384 = vpop.f32.mrf.mxu0
      %v1385 = vadd.f32 %v1288, %v1384
      %v1386 = vpop.f32.mrf.mxu0
      %v1387 = vpop.f32.mrf.mxu0
      %v1388 = vadd.f32 %v1291, %v1387
      %v1389 = vpop.f32.mrf.mxu0
      %1390 = vdwg.mxu0
      %vm1391 = vcmp.ge.s32.totalorder %v228, 4
      %vm1392 = vcmp.lt.s32.totalorder %v228, 8
      %vm1393 = vmand %vm1391, %vm1392
      %v1394 = vtanh.pop %v1329
      %v1395 = vtanh.pop %v1332
      %v1396 = vtanh.pop %v1337
      %v1397 = vtanh.pop %v1340
      %v1398 = vtanh.pop %v1345
      %v1399 = vtanh.pop %v1348
      %v1400 = vtanh.pop %v1353
      %v1401 = vtanh.pop %v1356
      %v1402 = vtanh.pop %v1361
      %v1403 = vtanh.pop %v1364
      %v1404 = vtanh.pop %v1369
      %v1405 = vtanh.pop %v1372
      %v1406 = vtanh.pop %v1377
      %v1407 = vtanh.pop %v1380
      %v1408 = vtanh.pop %v1385
      %v1409 = vtanh.pop %v1388
      %v1410 = vmax.f32 %v1329, 0.0
      %v1411 = vmax.f32 %v1332, 0.0
      %v1412 = vmax.f32 %v1337, 0.0
      %v1413 = vmax.f32 %v1340, 0.0
      %v1414 = vmax.f32 %v1345, 0.0
      %v1415 = vmax.f32 %v1348, 0.0
      %v1416 = vmax.f32 %v1353, 0.0
      %v1417 = vmax.f32 %v1356, 0.0
      %v1418 = vmax.f32 %v1361, 0.0
      %v1419 = vmax.f32 %v1364, 0.0
      %v1420 = vmax.f32 %v1369, 0.0
      %v1421 = vmax.f32 %v1372, 0.0
      %v1422 = vmax.f32 %v1377, 0.0
      %v1423 = vmax.f32 %v1380, 0.0
      %v1424 = vmax.f32 %v1385, 0.0
      %v1425 = vmax.f32 %v1388, 0.0
      %v1426 = vsel %vm1393, %v1394, %v1410
      %v1427 = vsel %vm1393, %v1395, %v1411
      %v1428 = vsel %vm1393, %v1396, %v1412
      %v1429 = vsel %vm1393, %v1397, %v1413
      %v1430 = vsel %vm1393, %v1398, %v1414
      %v1431 = vsel %vm1393, %v1399, %v1415
      %v1432 = vsel %vm1393, %v1400, %v1416
      %v1433 = vsel %vm1393, %v1401, %v1417
      %v1434 = vsel %vm1393, %v1402, %v1418
      %v1435 = vsel %vm1393, %v1403, %v1419
      %v1436 = vsel %vm1393, %v1404, %v1420
      %v1437 = vsel %vm1393, %v1405, %v1421
      %v1438 = vsel %vm1393, %v1406, %v1422
      %v1439 = vsel %vm1393, %v1407, %v1423
      %v1440 = vsel %vm1393, %v1408, %v1424
      %v1441 = vsel %vm1393, %v1409, %v1425
      %v1442 = vld [vmem:[%s2 + $0x190] sm:$0xf]
      %v1443 = vld [vmem:[%s2 + $0x194] sm:$0xf]
      %v1444 = vld [vmem:[%s2 + $0x198] sm:$0xf]
      %v1445 = vld [vmem:[%s2 + $0x19c] sm:$0xf]
      %v1446 = vld [vmem:[%s2 + $0x1a0] sm:$0xf]
      %v1447 = vld [vmem:[%s2 + $0x1a4] sm:$0xf]
      %v1448 = vld [vmem:[%s2 + $0x1a8] sm:$0xf]
      %v1449 = vld [vmem:[%s2 + $0x1ac] sm:$0xf]
      %v1450 = vld [vmem:[%s2 + $0x1b0] sm:$0xf]
      %v1451 = vld [vmem:[%s2 + $0x1b4] sm:$0xf]
      %v1452 = vld [vmem:[%s2 + $0x1b8] sm:$0xf]
      %v1453 = vld [vmem:[%s2 + $0x1bc] sm:$0xf]
      %v1454 = vld [vmem:[%s2 + $0x1c0] sm:$0xf]
      %v1455 = vld [vmem:[%s2 + $0x1c4] sm:$0xf]
      %v1456 = vld [vmem:[%s2 + $0x1c8] sm:$0xf]
      %v1457 = vld [vmem:[%s2 + $0x1cc] sm:$0xf]
      %v1458 = vpack.c.bf16 %v1427, %v1426
      %v1459 = vpack.c.bf16 %v1429, %v1428
      %v1460 = vpack.c.bf16 %v1431, %v1430
      %v1461 = vpack.c.bf16 %v1433, %v1432
      %v1462 = vpack.c.bf16 %v1435, %v1434
      %v1463 = vpack.c.bf16 %v1437, %v1436
      %v1464 = vpack.c.bf16 %v1439, %v1438
      %v1465 = vpack.c.bf16 %v1441, %v1440
      %v1466 = vld [vmem:[%s3 + $0x1] sm:$0x1]
      %v1467 = vlaneseq
      %v1468 = vshrl.u32 %v1467, 7
      %v1469 = vsub.s32 0, %v1468
      %v1470 = vrot.slane %v1466, %v1469
      %v1487 = vunpack.c.l.b16 %v1442
      %v1488 = vunpack.c.l.b16 %v1443
      %v1489 = vunpack.c.l.b16 %v1444
      %v1490 = vunpack.c.l.b16 %v1445
      %v1491 = vunpack.c.l.b16 %v1446
      %v1492 = vunpack.c.l.b16 %v1447
      %v1493 = vunpack.c.l.b16 %v1448
      %v1494 = vunpack.c.l.b16 %v1449
      %v1495 = vunpack.c.l.b16 %v1450
      %v1496 = vunpack.c.l.b16 %v1451
      %v1497 = vunpack.c.l.b16 %v1452
      %v1498 = vunpack.c.l.b16 %v1453
      %v1499 = vunpack.c.l.b16 %v1454
      %v1500 = vunpack.c.l.b16 %v1455
      %v1501 = vunpack.c.l.b16 %v1456
      %v1502 = vunpack.c.l.b16 %v1457
      %v1503 = vpack.c.b16 %v1488, %v1487
      %v1504 = vpack.c.b16 %v1490, %v1489
      %v1505 = vpack.c.b16 %v1492, %v1491
      %v1506 = vpack.c.b16 %v1494, %v1493
      %v1507 = vpack.c.b16 %v1496, %v1495
      %v1508 = vpack.c.b16 %v1498, %v1497
      %v1509 = vpack.c.b16 %v1500, %v1499
      %v1510 = vpack.c.b16 %v1502, %v1501
      %1519 = vmatprep.subr.bf16.mxu0 0
      %1520 = vmatpush1.bf16.msra.mxu0 %v1510
      %1521 = vmatprep.subr.bf16.mxu0 0
      %1522 = vmatpush1.bf16.msra.mxu0 %v1509
      %1523 = vmatprep.subr.bf16.mxu0 0
      %1524 = vmatpush1.bf16.msra.mxu0 %v1508
      %1525 = vmatprep.subr.bf16.mxu0 0
      %1526 = vmatpush1.bf16.msra.mxu0 %v1507
      %1527 = vmatprep.subr.bf16.mxu0 0
      %1528 = vmatpush1.bf16.msra.mxu0 %v1506
      %1529 = vmatprep.subr.bf16.mxu0 0
      %1530 = vmatpush1.bf16.msra.mxu0 %v1505
      %1531 = vmatprep.subr.bf16.mxu0 0
      %1532 = vmatpush1.bf16.msra.mxu0 %v1504
      %1533 = vmatprep.subr.bf16.mxu0 0
      %1534 = vmatpush1.bf16.msra.mxu0 %v1503
      %1535 = vmatprep.subr.bf16.mxu0 0
      %1536 = vmatpush2.bf16.msra.mxu0 0
      %1537 = vmatprep.subr.bf16.mxu0 0
      %1538 = vmatpush2.bf16.msra.mxu0 0
      %1539 = vmatprep.subr.bf16.mxu0 0
      %1540 = vmatpush2.bf16.msra.mxu0 0
      %1541 = vmatprep.subr.bf16.mxu0 0
      %1542 = vmatpush2.bf16.msra.mxu0 0
      %1543 = vmatprep.subr.bf16.mxu0 0
      %1544 = vmatpush2.bf16.msra.mxu0 0
      %1545 = vmatprep.subr.bf16.mxu0 0
      %1546 = vmatpush2.bf16.msra.mxu0 0
      %1547 = vmatprep.subr.bf16.mxu0 0
      %1548 = vmatpush2.bf16.msra.mxu0 0
      %1549 = vmatprep.subr.bf16.mxu0 0
      %1550 = vmatpush2.bf16.msra.mxu0 0
      %1551 = vmatprep.mubr.bf16.mxu0 0
      %1552 = vmatmul.mubr.bf16.gmra.mxu0 %v1458
      %v1553 = vpop.f32.mrf.mxu0
      %v1554 = vadd.f32 %v1470, %v1553
      %v1555 = vpop.f32.mrf.mxu0
      %v1556 = vpop.f32.mrf.mxu0
      %v1557 = vadd.f32 %v1470, %v1556
      %v1558 = vpop.f32.mrf.mxu0
      %1559 = vmatprep.mubr.bf16.mxu0 0
      %1560 = vmatmul.mubr.bf16.gmra.mxu0 %v1459
      %v1561 = vpop.f32.mrf.mxu0
      %v1562 = vadd.f32 %v1470, %v1561
      %v1563 = vpop.f32.mrf.mxu0
      %v1564 = vpop.f32.mrf.mxu0
      %v1565 = vadd.f32 %v1470, %v1564
      %v1566 = vpop.f32.mrf.mxu0
      %1567 = vmatprep.mubr.bf16.mxu0 0
      %1568 = vmatmul.mubr.bf16.gmra.mxu0 %v1460
      %v1569 = vpop.f32.mrf.mxu0
      %v1570 = vadd.f32 %v1470, %v1569
      %v1571 = vpop.f32.mrf.mxu0
      %v1572 = vpop.f32.mrf.mxu0
      %v1573 = vadd.f32 %v1470, %v1572
      %v1574 = vpop.f32.mrf.mxu0
      %1575 = vmatprep.mubr.bf16.mxu0 0
      %1576 = vmatmul.mubr.bf16.gmra.mxu0 %v1461
      %v1577 = vpop.f32.mrf.mxu0
      %v1578 = vadd.f32 %v1470, %v1577
      %v1579 = vpop.f32.mrf.mxu0
      %v1580 = vpop.f32.mrf.mxu0
      %v1581 = vadd.f32 %v1470, %v1580
      %v1582 = vpop.f32.mrf.mxu0
      %1583 = vmatprep.mubr.bf16.mxu0 0
      %1584 = vmatmul.mubr.bf16.gmra.mxu0 %v1462
      %v1585 = vpop.f32.mrf.mxu0
      %v1586 = vadd.f32 %v1470, %v1585
      %v1587 = vpop.f32.mrf.mxu0
      %v1588 = vpop.f32.mrf.mxu0
      %v1589 = vadd.f32 %v1470, %v1588
      %v1590 = vpop.f32.mrf.mxu0
      %1591 = vmatprep.mubr.bf16.mxu0 0
      %1592 = vmatmul.mubr.bf16.gmra.mxu0 %v1463
      %v1593 = vpop.f32.mrf.mxu0
      %v1594 = vadd.f32 %v1470, %v1593
      %v1595 = vpop.f32.mrf.mxu0
      %v1596 = vpop.f32.mrf.mxu0
      %v1597 = vadd.f32 %v1470, %v1596
      %v1598 = vpop.f32.mrf.mxu0
      %1599 = vmatprep.mubr.bf16.mxu0 0
      %1600 = vmatmul.mubr.bf16.gmra.mxu0 %v1464
      %v1601 = vpop.f32.mrf.mxu0
      %v1602 = vadd.f32 %v1470, %v1601
      %v1603 = vpop.f32.mrf.mxu0
      %v1604 = vpop.f32.mrf.mxu0
      %v1605 = vadd.f32 %v1470, %v1604
      %v1606 = vpop.f32.mrf.mxu0
      %1607 = vmatprep.mubr.bf16.mxu0 0
      %1608 = vmatmul.mubr.bf16.gmra.mxu0 %v1465
      %v1609 = vpop.f32.mrf.mxu0
      %v1610 = vadd.f32 %v1470, %v1609
      %v1611 = vpop.f32.mrf.mxu0
      %v1612 = vpop.f32.mrf.mxu0
      %v1613 = vadd.f32 %v1470, %v1612
      %v1614 = vpop.f32.mrf.mxu0
      %1615 = vdwg.mxu0
      %v1616 = vmax.f32 %v1554, 0.0
      %v1617 = vmax.f32 %v1557, 0.0
      %v1618 = vmax.f32 %v1562, 0.0
      %v1619 = vmax.f32 %v1565, 0.0
      %v1620 = vmax.f32 %v1570, 0.0
      %v1621 = vmax.f32 %v1573, 0.0
      %v1622 = vmax.f32 %v1578, 0.0
      %v1623 = vmax.f32 %v1581, 0.0
      %v1624 = vmax.f32 %v1586, 0.0
      %v1625 = vmax.f32 %v1589, 0.0
      %v1626 = vmax.f32 %v1594, 0.0
      %v1627 = vmax.f32 %v1597, 0.0
      %v1628 = vmax.f32 %v1602, 0.0
      %v1629 = vmax.f32 %v1605, 0.0
      %v1630 = vmax.f32 %v1610, 0.0
      %v1631 = vmax.f32 %v1613, 0.0
      %v1632 = vld [vmem:[%s2 + $0x1d0] sm:$0xf]
      %v1633 = vld [vmem:[%s2 + $0x1d4] sm:$0xf]
      %v1634 = vld [vmem:[%s2 + $0x1d8] sm:$0xf]
      %v1635 = vld [vmem:[%s2 + $0x1dc] sm:$0xf]
      %v1636 = vld [vmem:[%s2 + $0x1e0] sm:$0xf]
      %v1637 = vld [vmem:[%s2 + $0x1e4] sm:$0xf]
      %v1638 = vld [vmem:[%s2 + $0x1e8] sm:$0xf]
      %v1639 = vld [vmem:[%s2 + $0x1ec] sm:$0xf]
      %v1640 = vld [vmem:[%s2 + $0x1f0] sm:$0xf]
      %v1641 = vld [vmem:[%s2 + $0x1f4] sm:$0xf]
      %v1642 = vld [vmem:[%s2 + $0x1f8] sm:$0xf]
      %v1643 = vld [vmem:[%s2 + $0x1fc] sm:$0xf]
      %v1644 = vld [vmem:[%s2 + $0x200] sm:$0xf]
      %v1645 = vld [vmem:[%s2 + $0x204] sm:$0xf]
      %v1646 = vld [vmem:[%s2 + $0x208] sm:$0xf]
      %v1647 = vld [vmem:[%s2 + $0x20c] sm:$0xf]
      %v1648 = vpack.c.bf16 %v1617, %v1616
      %v1649 = vpack.c.bf16 %v1619, %v1618
      %v1650 = vpack.c.bf16 %v1621, %v1620
      %v1651 = vpack.c.bf16 %v1623, %v1622
      %v1652 = vpack.c.bf16 %v1625, %v1624
      %v1653 = vpack.c.bf16 %v1627, %v1626
      %v1654 = vpack.c.bf16 %v1629, %v1628
      %v1655 = vpack.c.bf16 %v1631, %v1630
      %v1656 = vld [vmem:[%s3 + $0x2] sm:$0x1]
      %v1657 = vlaneseq
      %v1658 = vshrl.u32 %v1657, 7
      %v1659 = vsub.s32 0, %v1658
      %v1660 = vrot.slane %v1656, %v1659
      %v1677 = vunpack.c.l.b16 %v1632
      %v1678 = vunpack.c.l.b16 %v1633
      %v1679 = vunpack.c.l.b16 %v1634
      %v1680 = vunpack.c.l.b16 %v1635
      %v1681 = vunpack.c.l.b16 %v1636
      %v1682 = vunpack.c.l.b16 %v1637
      %v1683 = vunpack.c.l.b16 %v1638
      %v1684 = vunpack.c.l.b16 %v1639
      %v1685 = vunpack.c.l.b16 %v1640
      %v1686 = vunpack.c.l.b16 %v1641
      %v1687 = vunpack.c.l.b16 %v1642
      %v1688 = vunpack.c.l.b16 %v1643
      %v1689 = vunpack.c.l.b16 %v1644
      %v1690 = vunpack.c.l.b16 %v1645
      %v1691 = vunpack.c.l.b16 %v1646
      %v1692 = vunpack.c.l.b16 %v1647
      %v1693 = vpack.c.b16 %v1678, %v1677
      %v1694 = vpack.c.b16 %v1680, %v1679
      %v1695 = vpack.c.b16 %v1682, %v1681
      %v1696 = vpack.c.b16 %v1684, %v1683
      %v1697 = vpack.c.b16 %v1686, %v1685
      %v1698 = vpack.c.b16 %v1688, %v1687
      %v1699 = vpack.c.b16 %v1690, %v1689
      %v1700 = vpack.c.b16 %v1692, %v1691
      %1709 = vmatprep.subr.bf16.mxu0 0
      %1710 = vmatpush1.bf16.msra.mxu0 %v1700
      %1711 = vmatprep.subr.bf16.mxu0 0
      %1712 = vmatpush1.bf16.msra.mxu0 %v1699
      %1713 = vmatprep.subr.bf16.mxu0 0
      %1714 = vmatpush1.bf16.msra.mxu0 %v1698
      %1715 = vmatprep.subr.bf16.mxu0 0
      %1716 = vmatpush1.bf16.msra.mxu0 %v1697
      %1717 = vmatprep.subr.bf16.mxu0 0
      %1718 = vmatpush1.bf16.msra.mxu0 %v1696
      %1719 = vmatprep.subr.bf16.mxu0 0
      %1720 = vmatpush1.bf16.msra.mxu0 %v1695
      %1721 = vmatprep.subr.bf16.mxu0 0
      %1722 = vmatpush1.bf16.msra.mxu0 %v1694
      %1723 = vmatprep.subr.bf16.mxu0 0
      %1724 = vmatpush1.bf16.msra.mxu0 %v1693
      %1725 = vmatprep.subr.bf16.mxu0 0
      %1726 = vmatpush2.bf16.msra.mxu0 0
      %1727 = vmatprep.subr.bf16.mxu0 0
      %1728 = vmatpush2.bf16.msra.mxu0 0
      %1729 = vmatprep.subr.bf16.mxu0 0
      %1730 = vmatpush2.bf16.msra.mxu0 0
      %1731 = vmatprep.subr.bf16.mxu0 0
      %1732 = vmatpush2.bf16.msra.mxu0 0
      %1733 = vmatprep.subr.bf16.mxu0 0
      %1734 = vmatpush2.bf16.msra.mxu0 0
      %1735 = vmatprep.subr.bf16.mxu0 0
      %1736 = vmatpush2.bf16.msra.mxu0 0
      %1737 = vmatprep.subr.bf16.mxu0 0
      %1738 = vmatpush2.bf16.msra.mxu0 0
      %1739 = vmatprep.subr.bf16.mxu0 0
      %1740 = vmatpush2.bf16.msra.mxu0 0
      %1741 = vmatprep.mubr.bf16.mxu0 0
      %1742 = vmatmul.mubr.bf16.gmra.mxu0 %v1648
      %v1743 = vpop.f32.mrf.mxu0
      %v1744 = vadd.f32 %v1660, %v1743
      %v1745 = vpop.f32.mrf.mxu0
      %v1746 = vpop.f32.mrf.mxu0
      %v1747 = vadd.f32 %v1660, %v1746
      %v1748 = vpop.f32.mrf.mxu0
      %1749 = vmatprep.mubr.bf16.mxu0 0
      %1750 = vmatmul.mubr.bf16.gmra.mxu0 %v1649
      %v1751 = vpop.f32.mrf.mxu0
      %v1752 = vadd.f32 %v1660, %v1751
      %v1753 = vpop.f32.mrf.mxu0
      %v1754 = vpop.f32.mrf.mxu0
      %v1755 = vadd.f32 %v1660, %v1754
      %v1756 = vpop.f32.mrf.mxu0
      %1757 = vmatprep.mubr.bf16.mxu0 0
      %1758 = vmatmul.mubr.bf16.gmra.mxu0 %v1650
      %v1759 = vpop.f32.mrf.mxu0
      %v1760 = vadd.f32 %v1660, %v1759
      %v1761 = vpop.f32.mrf.mxu0
      %v1762 = vpop.f32.mrf.mxu0
      %v1763 = vadd.f32 %v1660, %v1762
      %v1764 = vpop.f32.mrf.mxu0
      %1765 = vmatprep.mubr.bf16.mxu0 0
      %1766 = vmatmul.mubr.bf16.gmra.mxu0 %v1651
      %v1767 = vpop.f32.mrf.mxu0
      %v1768 = vadd.f32 %v1660, %v1767
      %v1769 = vpop.f32.mrf.mxu0
      %v1770 = vpop.f32.mrf.mxu0
      %v1771 = vadd.f32 %v1660, %v1770
      %v1772 = vpop.f32.mrf.mxu0
      %1773 = vmatprep.mubr.bf16.mxu0 0
      %1774 = vmatmul.mubr.bf16.gmra.mxu0 %v1652
      %v1775 = vpop.f32.mrf.mxu0
      %v1776 = vadd.f32 %v1660, %v1775
      %v1777 = vpop.f32.mrf.mxu0
      %v1778 = vpop.f32.mrf.mxu0
      %v1779 = vadd.f32 %v1660, %v1778
      %v1780 = vpop.f32.mrf.mxu0
      %1781 = vmatprep.mubr.bf16.mxu0 0
      %1782 = vmatmul.mubr.bf16.gmra.mxu0 %v1653
      %v1783 = vpop.f32.mrf.mxu0
      %v1784 = vadd.f32 %v1660, %v1783
      %v1785 = vpop.f32.mrf.mxu0
      %v1786 = vpop.f32.mrf.mxu0
      %v1787 = vadd.f32 %v1660, %v1786
      %v1788 = vpop.f32.mrf.mxu0
      %1789 = vmatprep.mubr.bf16.mxu0 0
      %1790 = vmatmul.mubr.bf16.gmra.mxu0 %v1654
      %v1791 = vpop.f32.mrf.mxu0
      %v1792 = vadd.f32 %v1660, %v1791
      %v1793 = vpop.f32.mrf.mxu0
      %v1794 = vpop.f32.mrf.mxu0
      %v1795 = vadd.f32 %v1660, %v1794
      %v1796 = vpop.f32.mrf.mxu0
      %1797 = vmatprep.mubr.bf16.mxu0 0
      %1798 = vmatmul.mubr.bf16.gmra.mxu0 %v1655
      %v1799 = vpop.f32.mrf.mxu0
      %v1800 = vadd.f32 %v1660, %v1799
      %v1801 = vpop.f32.mrf.mxu0
      %v1802 = vpop.f32.mrf.mxu0
      %v1803 = vadd.f32 %v1660, %v1802
      %v1804 = vpop.f32.mrf.mxu0
      %1805 = vdwg.mxu0
      %vm1806 = vcmp.lt.s32.totalorder %v228, 16
      %v1807 = vsel %vm1806, %v1744, 0.0
      %v1808 = vsel %vm1806, %v1747, 0.0
      %v1809 = vsel %vm1806, %v1752, 0.0
      %v1810 = vsel %vm1806, %v1755, 0.0
      %v1811 = vsel %vm1806, %v1760, 0.0
      %v1812 = vsel %vm1806, %v1763, 0.0
      %v1813 = vsel %vm1806, %v1768, 0.0
      %v1814 = vsel %vm1806, %v1771, 0.0
      %v1815 = vsel %vm1806, %v1776, 0.0
      %v1816 = vsel %vm1806, %v1779, 0.0
      %v1817 = vsel %vm1806, %v1784, 0.0
      %v1818 = vsel %vm1806, %v1787, 0.0
      %v1819 = vsel %vm1806, %v1792, 0.0
      %v1820 = vsel %vm1806, %v1795, 0.0
      %v1821 = vsel %vm1806, %v1800, 0.0
      %v1822 = vsel %vm1806, %v1803, 0.0
      %v1823 = vsel %vm1392, %v1426, %v1807
      %v1824 = vsel %vm1392, %v1427, %v1808
      %v1825 = vsel %vm1392, %v1428, %v1809
      %v1826 = vsel %vm1392, %v1429, %v1810
      %v1827 = vsel %vm1392, %v1430, %v1811
      %v1828 = vsel %vm1392, %v1431, %v1812
      %v1829 = vsel %vm1392, %v1432, %v1813
      %v1830 = vsel %vm1392, %v1433, %v1814
      %v1831 = vsel %vm1392, %v1434, %v1815
      %v1832 = vsel %vm1392, %v1435, %v1816
      %v1833 = vsel %vm1392, %v1436, %v1817
      %v1834 = vsel %vm1392, %v1437, %v1818
      %v1835 = vsel %vm1392, %v1438, %v1819
      %v1836 = vsel %vm1392, %v1439, %v1820
      %v1837 = vsel %vm1392, %v1440, %v1821
      %v1838 = vsel %vm1392, %v1441, %v1822
      %v1839 = vmul.f32 %v1744, 1.442695
      %v1840 = vpow.pop %v1839
      %v1841 = vmul.f32 %v1747, 1.442695
      %v1842 = vpow.pop %v1841
      %v1843 = vmul.f32 %v1752, 1.442695
      %v1844 = vpow.pop %v1843
      %v1845 = vmul.f32 %v1755, 1.442695
      %v1846 = vpow.pop %v1845
      %v1847 = vmul.f32 %v1760, 1.442695
      %v1848 = vpow.pop %v1847
      %v1849 = vmul.f32 %v1763, 1.442695
      %v1850 = vpow.pop %v1849
      %v1851 = vmul.f32 %v1768, 1.442695
      %v1852 = vpow.pop %v1851
      %v1853 = vmul.f32 %v1771, 1.442695
      %v1854 = vpow.pop %v1853
      %v1855 = vmul.f32 %v1776, 1.442695
      %v1856 = vpow.pop %v1855
      %v1857 = vmul.f32 %v1779, 1.442695
      %v1858 = vpow.pop %v1857
      %v1859 = vmul.f32 %v1784, 1.442695
      %v1860 = vpow.pop %v1859
      %v1861 = vmul.f32 %v1787, 1.442695
      %v1862 = vpow.pop %v1861
      %v1863 = vmul.f32 %v1792, 1.442695
      %v1864 = vpow.pop %v1863
      %v1865 = vmul.f32 %v1795, 1.442695
      %v1866 = vpow.pop %v1865
      %v1867 = vmul.f32 %v1800, 1.442695
      %v1868 = vpow.pop %v1867
      %v1869 = vmul.f32 %v1803, 1.442695
      %v1870 = vpow.pop %v1869
      %v1871 = vld [vmem:[%s218] sm:$0xff]
      %v1872 = vld [vmem:[%s218 + $0x8] sm:$0xff]
      %v1873 = vld [vmem:[%s218 + $0x10] sm:$0xff]
      %v1874 = vld [vmem:[%s218 + $0x18] sm:$0xff]
      %v1875 = vld [vmem:[%s218 + $0x20] sm:$0xff]
      %v1876 = vld [vmem:[%s218 + $0x28] sm:$0xff]
      %v1877 = vld [vmem:[%s218 + $0x30] sm:$0xff]
      %v1878 = vld [vmem:[%s218 + $0x38] sm:$0xff]
      %v1879 = vld [vmem:[%s218 + $0x40] sm:$0xff]
      %v1880 = vld [vmem:[%s218 + $0x48] sm:$0xff]
      %v1881 = vld [vmem:[%s218 + $0x50] sm:$0xff]
      %v1882 = vld [vmem:[%s218 + $0x58] sm:$0xff]
      %v1883 = vld [vmem:[%s218 + $0x60] sm:$0xff]
      %v1884 = vld [vmem:[%s218 + $0x68] sm:$0xff]
      %v1885 = vld [vmem:[%s218 + $0x70] sm:$0xff]
      %v1886 = vld [vmem:[%s218 + $0x78] sm:$0xff]
      %v1887 = vmul.f32 %v1840, %v1871
      %v1888 = vmul.f32 %v1842, %v1872
      %v1889 = vmul.f32 %v1844, %v1873
      %v1890 = vmul.f32 %v1846, %v1874
      %v1891 = vmul.f32 %v1848, %v1875
      %v1892 = vmul.f32 %v1850, %v1876
      %v1893 = vmul.f32 %v1852, %v1877
      %v1894 = vmul.f32 %v1854, %v1878
      %v1895 = vmul.f32 %v1856, %v1879
      %v1896 = vmul.f32 %v1858, %v1880
      %v1897 = vmul.f32 %v1860, %v1881
      %v1898 = vmul.f32 %v1862, %v1882
      %v1899 = vmul.f32 %v1864, %v1883
      %v1900 = vmul.f32 %v1866, %v1884
      %v1901 = vmul.f32 %v1868, %v1885
      %v1902 = vmul.f32 %v1870, %v1886
      %v1903 = vadd.f32 %v1823, %v1887
      %v1904 = vadd.f32 %v1824, %v1888
      %v1905 = vadd.f32 %v1825, %v1889
      %v1906 = vadd.f32 %v1826, %v1890
      %v1907 = vadd.f32 %v1827, %v1891
      %v1908 = vadd.f32 %v1828, %v1892
      %v1909 = vadd.f32 %v1829, %v1893
      %v1910 = vadd.f32 %v1830, %v1894
      %v1911 = vadd.f32 %v1831, %v1895
      %v1912 = vadd.f32 %v1832, %v1896
      %v1913 = vadd.f32 %v1833, %v1897
      %v1914 = vadd.f32 %v1834, %v1898
      %v1915 = vadd.f32 %v1835, %v1899
      %v1916 = vadd.f32 %v1836, %v1900
      %v1917 = vadd.f32 %v1837, %v1901
      %v1918 = vadd.f32 %v1838, %v1902
      %v1919 = vld [vmem:[%s2 + $0x210] sm:$0xf]
      %v1920 = vld [vmem:[%s2 + $0x214] sm:$0xf]
      %v1921 = vld [vmem:[%s2 + $0x218] sm:$0xf]
      %v1922 = vld [vmem:[%s2 + $0x21c] sm:$0xf]
      %v1923 = vld [vmem:[%s2 + $0x220] sm:$0xf]
      %v1924 = vld [vmem:[%s2 + $0x224] sm:$0xf]
      %v1925 = vld [vmem:[%s2 + $0x228] sm:$0xf]
      %v1926 = vld [vmem:[%s2 + $0x22c] sm:$0xf]
      %v1927 = vld [vmem:[%s2 + $0x230] sm:$0xf]
      %v1928 = vld [vmem:[%s2 + $0x234] sm:$0xf]
      %v1929 = vld [vmem:[%s2 + $0x238] sm:$0xf]
      %v1930 = vld [vmem:[%s2 + $0x23c] sm:$0xf]
      %v1931 = vld [vmem:[%s2 + $0x240] sm:$0xf]
      %v1932 = vld [vmem:[%s2 + $0x244] sm:$0xf]
      %v1933 = vld [vmem:[%s2 + $0x248] sm:$0xf]
      %v1934 = vld [vmem:[%s2 + $0x24c] sm:$0xf]
      %v1935 = vpack.c.bf16 %v1904, %v1903
      %v1936 = vpack.c.bf16 %v1906, %v1905
      %v1937 = vpack.c.bf16 %v1908, %v1907
      %v1938 = vpack.c.bf16 %v1910, %v1909
      %v1939 = vpack.c.bf16 %v1912, %v1911
      %v1940 = vpack.c.bf16 %v1914, %v1913
      %v1941 = vpack.c.bf16 %v1916, %v1915
      %v1942 = vpack.c.bf16 %v1918, %v1917
      %v1943 = vld [vmem:[%s3 + $0x3] sm:$0x1]
      %v1944 = vlaneseq
      %v1945 = vshrl.u32 %v1944, 7
      %v1946 = vsub.s32 0, %v1945
      %v1947 = vrot.slane %v1943, %v1946
      %v1964 = vunpack.c.l.b16 %v1919
      %v1965 = vunpack.c.l.b16 %v1920
      %v1966 = vunpack.c.l.b16 %v1921
      %v1967 = vunpack.c.l.b16 %v1922
      %v1968 = vunpack.c.l.b16 %v1923
      %v1969 = vunpack.c.l.b16 %v1924
      %v1970 = vunpack.c.l.b16 %v1925
      %v1971 = vunpack.c.l.b16 %v1926
      %v1972 = vunpack.c.l.b16 %v1927
      %v1973 = vunpack.c.l.b16 %v1928
      %v1974 = vunpack.c.l.b16 %v1929
      %v1975 = vunpack.c.l.b16 %v1930
      %v1976 = vunpack.c.l.b16 %v1931
      %v1977 = vunpack.c.l.b16 %v1932
      %v1978 = vunpack.c.l.b16 %v1933
      %v1979 = vunpack.c.l.b16 %v1934
      %v1980 = vpack.c.b16 %v1965, %v1964
      %v1981 = vpack.c.b16 %v1967, %v1966
      %v1982 = vpack.c.b16 %v1969, %v1968
      %v1983 = vpack.c.b16 %v1971, %v1970
      %v1984 = vpack.c.b16 %v1973, %v1972
      %v1985 = vpack.c.b16 %v1975, %v1974
      %v1986 = vpack.c.b16 %v1977, %v1976
      %v1987 = vpack.c.b16 %v1979, %v1978
      %1996 = vmatprep.subr.bf16.mxu0 0
      %1997 = vmatpush1.bf16.msra.mxu0 %v1987
      %1998 = vmatprep.subr.bf16.mxu0 0
      %1999 = vmatpush1.bf16.msra.mxu0 %v1986
      %2000 = vmatprep.subr.bf16.mxu0 0
      %2001 = vmatpush1.bf16.msra.mxu0 %v1985
      %2002 = vmatprep.subr.bf16.mxu0 0
      %2003 = vmatpush1.bf16.msra.mxu0 %v1984
      %2004 = vmatprep.subr.bf16.mxu0 0
      %2005 = vmatpush1.bf16.msra.mxu0 %v1983
      %2006 = vmatprep.subr.bf16.mxu0 0
      %2007 = vmatpush1.bf16.msra.mxu0 %v1982
      %2008 = vmatprep.subr.bf16.mxu0 0
      %2009 = vmatpush1.bf16.msra.mxu0 %v1981
      %2010 = vmatprep.subr.bf16.mxu0 0
      %2011 = vmatpush1.bf16.msra.mxu0 %v1980
      %2012 = vmatprep.subr.bf16.mxu0 0
      %2013 = vmatpush2.bf16.msra.mxu0 0
      %2014 = vmatprep.subr.bf16.mxu0 0
      %2015 = vmatpush2.bf16.msra.mxu0 0
      %2016 = vmatprep.subr.bf16.mxu0 0
      %2017 = vmatpush2.bf16.msra.mxu0 0
      %2018 = vmatprep.subr.bf16.mxu0 0
      %2019 = vmatpush2.bf16.msra.mxu0 0
      %2020 = vmatprep.subr.bf16.mxu0 0
      %2021 = vmatpush2.bf16.msra.mxu0 0
      %2022 = vmatprep.subr.bf16.mxu0 0
      %2023 = vmatpush2.bf16.msra.mxu0 0
      %2024 = vmatprep.subr.bf16.mxu0 0
      %2025 = vmatpush2.bf16.msra.mxu0 0
      %2026 = vmatprep.subr.bf16.mxu0 0
      %2027 = vmatpush2.bf16.msra.mxu0 0
      %2028 = vmatprep.mubr.bf16.mxu0 0
      %2029 = vmatmul.mubr.bf16.gmra.mxu0 %v1935
      %v2030 = vpop.f32.mrf.mxu0
      %v2031 = vadd.f32 %v1947, %v2030
      %v2032 = vpop.f32.mrf.mxu0
      %v2033 = vpop.f32.mrf.mxu0
      %v2034 = vadd.f32 %v1947, %v2033
      %v2035 = vpop.f32.mrf.mxu0
      %2036 = vmatprep.mubr.bf16.mxu0 0
      %2037 = vmatmul.mubr.bf16.gmra.mxu0 %v1936
      %v2038 = vpop.f32.mrf.mxu0
      %v2039 = vadd.f32 %v1947, %v2038
      %v2040 = vpop.f32.mrf.mxu0
      %v2041 = vpop.f32.mrf.mxu0
      %v2042 = vadd.f32 %v1947, %v2041
      %v2043 = vpop.f32.mrf.mxu0
      %2044 = vmatprep.mubr.bf16.mxu0 0
      %2045 = vmatmul.mubr.bf16.gmra.mxu0 %v1937
      %v2046 = vpop.f32.mrf.mxu0
      %v2047 = vadd.f32 %v1947, %v2046
      %v2048 = vpop.f32.mrf.mxu0
      %v2049 = vpop.f32.mrf.mxu0
      %v2050 = vadd.f32 %v1947, %v2049
      %v2051 = vpop.f32.mrf.mxu0
      %2052 = vmatprep.mubr.bf16.mxu0 0
      %2053 = vmatmul.mubr.bf16.gmra.mxu0 %v1938
      %v2054 = vpop.f32.mrf.mxu0
      %v2055 = vadd.f32 %v1947, %v2054
      %v2056 = vpop.f32.mrf.mxu0
      %v2057 = vpop.f32.mrf.mxu0
      %v2058 = vadd.f32 %v1947, %v2057
      %v2059 = vpop.f32.mrf.mxu0
      %2060 = vmatprep.mubr.bf16.mxu0 0
      %2061 = vmatmul.mubr.bf16.gmra.mxu0 %v1939
      %v2062 = vpop.f32.mrf.mxu0
      %v2063 = vadd.f32 %v1947, %v2062
      %v2064 = vpop.f32.mrf.mxu0
      %v2065 = vpop.f32.mrf.mxu0
      %v2066 = vadd.f32 %v1947, %v2065
      %v2067 = vpop.f32.mrf.mxu0
      %2068 = vmatprep.mubr.bf16.mxu0 0
      %2069 = vmatmul.mubr.bf16.gmra.mxu0 %v1940
      %v2070 = vpop.f32.mrf.mxu0
      %v2071 = vadd.f32 %v1947, %v2070
      %v2072 = vpop.f32.mrf.mxu0
      %v2073 = vpop.f32.mrf.mxu0
      %v2074 = vadd.f32 %v1947, %v2073
      %v2075 = vpop.f32.mrf.mxu0
      %2076 = vmatprep.mubr.bf16.mxu0 0
      %2077 = vmatmul.mubr.bf16.gmra.mxu0 %v1941
      %v2078 = vpop.f32.mrf.mxu0
      %v2079 = vadd.f32 %v1947, %v2078
      %v2080 = vpop.f32.mrf.mxu0
      %v2081 = vpop.f32.mrf.mxu0
      %v2082 = vadd.f32 %v1947, %v2081
      %v2083 = vpop.f32.mrf.mxu0
      %2084 = vmatprep.mubr.bf16.mxu0 0
      %2085 = vmatmul.mubr.bf16.gmra.mxu0 %v1942
      %v2086 = vpop.f32.mrf.mxu0
      %v2087 = vadd.f32 %v1947, %v2086
      %v2088 = vpop.f32.mrf.mxu0
      %v2089 = vpop.f32.mrf.mxu0
      %v2090 = vadd.f32 %v1947, %v2089
      %v2091 = vpop.f32.mrf.mxu0
      %2092 = vdwg.mxu0
      %v2093 = vmax.f32 %v2031, 0.0
      %v2094 = vmax.f32 %v2034, 0.0
      %v2095 = vmax.f32 %v2039, 0.0
      %v2096 = vmax.f32 %v2042, 0.0
      %v2097 = vmax.f32 %v2047, 0.0
      %v2098 = vmax.f32 %v2050, 0.0
      %v2099 = vmax.f32 %v2055, 0.0
      %v2100 = vmax.f32 %v2058, 0.0
      %v2101 = vmax.f32 %v2063, 0.0
      %v2102 = vmax.f32 %v2066, 0.0
      %v2103 = vmax.f32 %v2071, 0.0
      %v2104 = vmax.f32 %v2074, 0.0
      %v2105 = vmax.f32 %v2079, 0.0
      %v2106 = vmax.f32 %v2082, 0.0
      %v2107 = vmax.f32 %v2087, 0.0
      %v2108 = vmax.f32 %v2090, 0.0
      %v2109 = vld [vmem:[%s2 + $0x250] sm:$0xf]
      %v2110 = vld [vmem:[%s2 + $0x254] sm:$0xf]
      %v2111 = vld [vmem:[%s2 + $0x258] sm:$0xf]
      %v2112 = vld [vmem:[%s2 + $0x25c] sm:$0xf]
      %v2113 = vld [vmem:[%s2 + $0x260] sm:$0xf]
      %v2114 = vld [vmem:[%s2 + $0x264] sm:$0xf]
      %v2115 = vld [vmem:[%s2 + $0x268] sm:$0xf]
      %v2116 = vld [vmem:[%s2 + $0x26c] sm:$0xf]
      %v2117 = vld [vmem:[%s2 + $0x270] sm:$0xf]
      %v2118 = vld [vmem:[%s2 + $0x274] sm:$0xf]
      %v2119 = vld [vmem:[%s2 + $0x278] sm:$0xf]
      %v2120 = vld [vmem:[%s2 + $0x27c] sm:$0xf]
      %v2121 = vld [vmem:[%s2 + $0x280] sm:$0xf]
      %v2122 = vld [vmem:[%s2 + $0x284] sm:$0xf]
      %v2123 = vld [vmem:[%s2 + $0x288] sm:$0xf]
      %v2124 = vld [vmem:[%s2 + $0x28c] sm:$0xf]
      %v2125 = vpack.c.bf16 %v2094, %v2093
      %v2126 = vpack.c.bf16 %v2096, %v2095
      %v2127 = vpack.c.bf16 %v2098, %v2097
      %v2128 = vpack.c.bf16 %v2100, %v2099
      %v2129 = vpack.c.bf16 %v2102, %v2101
      %v2130 = vpack.c.bf16 %v2104, %v2103
      %v2131 = vpack.c.bf16 %v2106, %v2105
      %v2132 = vpack.c.bf16 %v2108, %v2107
      %v2133 = vld [vmem:[%s3 + $0x4] sm:$0x1]
      %v2134 = vlaneseq
      %v2135 = vshrl.u32 %v2134, 7
      %v2136 = vsub.s32 0, %v2135
      %v2137 = vrot.slane %v2133, %v2136
      %v2154 = vunpack.c.l.b16 %v2109
      %v2155 = vunpack.c.l.b16 %v2110
      %v2156 = vunpack.c.l.b16 %v2111
      %v2157 = vunpack.c.l.b16 %v2112
      %v2158 = vunpack.c.l.b16 %v2113
      %v2159 = vunpack.c.l.b16 %v2114
      %v2160 = vunpack.c.l.b16 %v2115
      %v2161 = vunpack.c.l.b16 %v2116
      %v2162 = vunpack.c.l.b16 %v2117
      %v2163 = vunpack.c.l.b16 %v2118
      %v2164 = vunpack.c.l.b16 %v2119
      %v2165 = vunpack.c.l.b16 %v2120
      %v2166 = vunpack.c.l.b16 %v2121
      %v2167 = vunpack.c.l.b16 %v2122
      %v2168 = vunpack.c.l.b16 %v2123
      %v2169 = vunpack.c.l.b16 %v2124
      %v2170 = vpack.c.b16 %v2155, %v2154
      %v2171 = vpack.c.b16 %v2157, %v2156
      %v2172 = vpack.c.b16 %v2159, %v2158
      %v2173 = vpack.c.b16 %v2161, %v2160
      %v2174 = vpack.c.b16 %v2163, %v2162
      %v2175 = vpack.c.b16 %v2165, %v2164
      %v2176 = vpack.c.b16 %v2167, %v2166
      %v2177 = vpack.c.b16 %v2169, %v2168
      %2186 = vmatprep.subr.bf16.mxu0 0
      %2187 = vmatpush1.bf16.msra.mxu0 %v2177
      %2188 = vmatprep.subr.bf16.mxu0 0
      %2189 = vmatpush1.bf16.msra.mxu0 %v2176
      %2190 = vmatprep.subr.bf16.mxu0 0
      %2191 = vmatpush1.bf16.msra.mxu0 %v2175
      %2192 = vmatprep.subr.bf16.mxu0 0
      %2193 = vmatpush1.bf16.msra.mxu0 %v2174
      %2194 = vmatprep.subr.bf16.mxu0 0
      %2195 = vmatpush1.bf16.msra.mxu0 %v2173
      %2196 = vmatprep.subr.bf16.mxu0 0
      %2197 = vmatpush1.bf16.msra.mxu0 %v2172
      %2198 = vmatprep.subr.bf16.mxu0 0
      %2199 = vmatpush1.bf16.msra.mxu0 %v2171
      %2200 = vmatprep.subr.bf16.mxu0 0
      %2201 = vmatpush1.bf16.msra.mxu0 %v2170
      %2202 = vmatprep.subr.bf16.mxu0 0
      %2203 = vmatpush2.bf16.msra.mxu0 0
      %2204 = vmatprep.subr.bf16.mxu0 0
      %2205 = vmatpush2.bf16.msra.mxu0 0
      %2206 = vmatprep.subr.bf16.mxu0 0
      %2207 = vmatpush2.bf16.msra.mxu0 0
      %2208 = vmatprep.subr.bf16.mxu0 0
      %2209 = vmatpush2.bf16.msra.mxu0 0
      %2210 = vmatprep.subr.bf16.mxu0 0
      %2211 = vmatpush2.bf16.msra.mxu0 0
      %2212 = vmatprep.subr.bf16.mxu0 0
      %2213 = vmatpush2.bf16.msra.mxu0 0
      %2214 = vmatprep.subr.bf16.mxu0 0
      %2215 = vmatpush2.bf16.msra.mxu0 0
      %2216 = vmatprep.subr.bf16.mxu0 0
      %2217 = vmatpush2.bf16.msra.mxu0 0
      %2218 = vmatprep.mubr.bf16.mxu0 0
      %2219 = vmatmul.mubr.bf16.gmra.mxu0 %v2125
      %v2220 = vpop.f32.mrf.mxu0
      %v2221 = vadd.f32 %v2137, %v2220
      %v2222 = vpop.f32.mrf.mxu0
      %v2223 = vpop.f32.mrf.mxu0
      %v2224 = vadd.f32 %v2137, %v2223
      %v2225 = vpop.f32.mrf.mxu0
      %2226 = vmatprep.mubr.bf16.mxu0 0
      %2227 = vmatmul.mubr.bf16.gmra.mxu0 %v2126
      %v2228 = vpop.f32.mrf.mxu0
      %v2229 = vadd.f32 %v2137, %v2228
      %v2230 = vpop.f32.mrf.mxu0
      %v2231 = vpop.f32.mrf.mxu0
      %v2232 = vadd.f32 %v2137, %v2231
      %v2233 = vpop.f32.mrf.mxu0
      %2234 = vmatprep.mubr.bf16.mxu0 0
      %2235 = vmatmul.mubr.bf16.gmra.mxu0 %v2127
      %v2236 = vpop.f32.mrf.mxu0
      %v2237 = vadd.f32 %v2137, %v2236
      %v2238 = vpop.f32.mrf.mxu0
      %v2239 = vpop.f32.mrf.mxu0
      %v2240 = vadd.f32 %v2137, %v2239
      %v2241 = vpop.f32.mrf.mxu0
      %2242 = vmatprep.mubr.bf16.mxu0 0
      %2243 = vmatmul.mubr.bf16.gmra.mxu0 %v2128
      %v2244 = vpop.f32.mrf.mxu0
      %v2245 = vadd.f32 %v2137, %v2244
      %v2246 = vpop.f32.mrf.mxu0
      %v2247 = vpop.f32.mrf.mxu0
      %v2248 = vadd.f32 %v2137, %v2247
      %v2249 = vpop.f32.mrf.mxu0
      %2250 = vmatprep.mubr.bf16.mxu0 0
      %2251 = vmatmul.mubr.bf16.gmra.mxu0 %v2129
      %v2252 = vpop.f32.mrf.mxu0
      %v2253 = vadd.f32 %v2137, %v2252
      %v2254 = vpop.f32.mrf.mxu0
      %v2255 = vpop.f32.mrf.mxu0
      %v2256 = vadd.f32 %v2137, %v2255
      %v2257 = vpop.f32.mrf.mxu0
      %2258 = vmatprep.mubr.bf16.mxu0 0
      %2259 = vmatmul.mubr.bf16.gmra.mxu0 %v2130
      %v2260 = vpop.f32.mrf.mxu0
      %v2261 = vadd.f32 %v2137, %v2260
      %v2262 = vpop.f32.mrf.mxu0
      %v2263 = vpop.f32.mrf.mxu0
      %v2264 = vadd.f32 %v2137, %v2263
      %v2265 = vpop.f32.mrf.mxu0
      %2266 = vmatprep.mubr.bf16.mxu0 0
      %2267 = vmatmul.mubr.bf16.gmra.mxu0 %v2131
      %v2268 = vpop.f32.mrf.mxu0
      %v2269 = vadd.f32 %v2137, %v2268
      %v2270 = vpop.f32.mrf.mxu0
      %v2271 = vpop.f32.mrf.mxu0
      %v2272 = vadd.f32 %v2137, %v2271
      %v2273 = vpop.f32.mrf.mxu0
      %2274 = vmatprep.mubr.bf16.mxu0 0
      %2275 = vmatmul.mubr.bf16.gmra.mxu0 %v2132
      %v2276 = vpop.f32.mrf.mxu0
      %v2277 = vadd.f32 %v2137, %v2276
      %v2278 = vpop.f32.mrf.mxu0
      %v2279 = vpop.f32.mrf.mxu0
      %v2280 = vadd.f32 %v2137, %v2279
      %v2281 = vpop.f32.mrf.mxu0
      %2282 = vdwg.mxu0
      %v2283 = vmax.f32 %v2221, 0.0
      %v2284 = vmax.f32 %v2224, 0.0
      %v2285 = vmax.f32 %v2229, 0.0
      %v2286 = vmax.f32 %v2232, 0.0
      %v2287 = vmax.f32 %v2237, 0.0
      %v2288 = vmax.f32 %v2240, 0.0
      %v2289 = vmax.f32 %v2245, 0.0
      %v2290 = vmax.f32 %v2248, 0.0
      %v2291 = vmax.f32 %v2253, 0.0
      %v2292 = vmax.f32 %v2256, 0.0
      %v2293 = vmax.f32 %v2261, 0.0
      %v2294 = vmax.f32 %v2264, 0.0
      %v2295 = vmax.f32 %v2269, 0.0
      %v2296 = vmax.f32 %v2272, 0.0
      %v2297 = vmax.f32 %v2277, 0.0
      %v2298 = vmax.f32 %v2280, 0.0
      %v2299 = vld [vmem:[%s2 + $0x290] sm:$0xf]
      %v2300 = vld [vmem:[%s2 + $0x294] sm:$0xf]
      %v2301 = vld [vmem:[%s2 + $0x298] sm:$0xf]
      %v2302 = vld [vmem:[%s2 + $0x29c] sm:$0xf]
      %v2303 = vld [vmem:[%s2 + $0x2a0] sm:$0xf]
      %v2304 = vld [vmem:[%s2 + $0x2a4] sm:$0xf]
      %v2305 = vld [vmem:[%s2 + $0x2a8] sm:$0xf]
      %v2306 = vld [vmem:[%s2 + $0x2ac] sm:$0xf]
      %v2307 = vld [vmem:[%s2 + $0x2b0] sm:$0xf]
      %v2308 = vld [vmem:[%s2 + $0x2b4] sm:$0xf]
      %v2309 = vld [vmem:[%s2 + $0x2b8] sm:$0xf]
      %v2310 = vld [vmem:[%s2 + $0x2bc] sm:$0xf]
      %v2311 = vld [vmem:[%s2 + $0x2c0] sm:$0xf]
      %v2312 = vld [vmem:[%s2 + $0x2c4] sm:$0xf]
      %v2313 = vld [vmem:[%s2 + $0x2c8] sm:$0xf]
      %v2314 = vld [vmem:[%s2 + $0x2cc] sm:$0xf]
      %v2315 = vpack.c.bf16 %v2284, %v2283
      %v2316 = vpack.c.bf16 %v2286, %v2285
      %v2317 = vpack.c.bf16 %v2288, %v2287
      %v2318 = vpack.c.bf16 %v2290, %v2289
      %v2319 = vpack.c.bf16 %v2292, %v2291
      %v2320 = vpack.c.bf16 %v2294, %v2293
      %v2321 = vpack.c.bf16 %v2296, %v2295
      %v2322 = vpack.c.bf16 %v2298, %v2297
      %v2323 = vld [vmem:[%s3 + $0x5] sm:$0x1]
      %v2324 = vlaneseq
      %v2325 = vshrl.u32 %v2324, 7
      %v2326 = vsub.s32 0, %v2325
      %v2327 = vrot.slane %v2323, %v2326
      %v2344 = vunpack.c.l.b16 %v2299
      %v2345 = vunpack.c.l.b16 %v2300
      %v2346 = vunpack.c.l.b16 %v2301
      %v2347 = vunpack.c.l.b16 %v2302
      %v2348 = vunpack.c.l.b16 %v2303
      %v2349 = vunpack.c.l.b16 %v2304
      %v2350 = vunpack.c.l.b16 %v2305
      %v2351 = vunpack.c.l.b16 %v2306
      %v2352 = vunpack.c.l.b16 %v2307
      %v2353 = vunpack.c.l.b16 %v2308
      %v2354 = vunpack.c.l.b16 %v2309
      %v2355 = vunpack.c.l.b16 %v2310
      %v2356 = vunpack.c.l.b16 %v2311
      %v2357 = vunpack.c.l.b16 %v2312
      %v2358 = vunpack.c.l.b16 %v2313
      %v2359 = vunpack.c.l.b16 %v2314
      %v2360 = vpack.c.b16 %v2345, %v2344
      %v2361 = vpack.c.b16 %v2347, %v2346
      %v2362 = vpack.c.b16 %v2349, %v2348
      %v2363 = vpack.c.b16 %v2351, %v2350
      %v2364 = vpack.c.b16 %v2353, %v2352
      %v2365 = vpack.c.b16 %v2355, %v2354
      %v2366 = vpack.c.b16 %v2357, %v2356
      %v2367 = vpack.c.b16 %v2359, %v2358
      %2376 = vmatprep.subr.bf16.mxu0 0
      %2377 = vmatpush1.bf16.msra.mxu0 %v2367
      %2378 = vmatprep.subr.bf16.mxu0 0
      %2379 = vmatpush1.bf16.msra.mxu0 %v2366
      %2380 = vmatprep.subr.bf16.mxu0 0
      %2381 = vmatpush1.bf16.msra.mxu0 %v2365
      %2382 = vmatprep.subr.bf16.mxu0 0
      %2383 = vmatpush1.bf16.msra.mxu0 %v2364
      %2384 = vmatprep.subr.bf16.mxu0 0
      %2385 = vmatpush1.bf16.msra.mxu0 %v2363
      %2386 = vmatprep.subr.bf16.mxu0 0
      %2387 = vmatpush1.bf16.msra.mxu0 %v2362
      %2388 = vmatprep.subr.bf16.mxu0 0
      %2389 = vmatpush1.bf16.msra.mxu0 %v2361
      %2390 = vmatprep.subr.bf16.mxu0 0
      %2391 = vmatpush1.bf16.msra.mxu0 %v2360
      %2392 = vmatprep.subr.bf16.mxu0 0
      %2393 = vmatpush2.bf16.msra.mxu0 0
      %2394 = vmatprep.subr.bf16.mxu0 0
      %2395 = vmatpush2.bf16.msra.mxu0 0
      %2396 = vmatprep.subr.bf16.mxu0 0
      %2397 = vmatpush2.bf16.msra.mxu0 0
      %2398 = vmatprep.subr.bf16.mxu0 0
      %2399 = vmatpush2.bf16.msra.mxu0 0
      %2400 = vmatprep.subr.bf16.mxu0 0
      %2401 = vmatpush2.bf16.msra.mxu0 0
      %2402 = vmatprep.subr.bf16.mxu0 0
      %2403 = vmatpush2.bf16.msra.mxu0 0
      %2404 = vmatprep.subr.bf16.mxu0 0
      %2405 = vmatpush2.bf16.msra.mxu0 0
      %2406 = vmatprep.subr.bf16.mxu0 0
      %2407 = vmatpush2.bf16.msra.mxu0 0
      %2408 = vmatprep.mubr.bf16.mxu0 0
      %2409 = vmatmul.mubr.bf16.gmra.mxu0 %v2315
      %v2410 = vpop.f32.mrf.mxu0
      %v2411 = vadd.f32 %v2327, %v2410
      %v2412 = vpop.f32.mrf.mxu0
      %v2413 = vpop.f32.mrf.mxu0
      %v2414 = vadd.f32 %v2327, %v2413
      %v2415 = vpop.f32.mrf.mxu0
      %2416 = vmatprep.mubr.bf16.mxu0 0
      %2417 = vmatmul.mubr.bf16.gmra.mxu0 %v2316
      %v2418 = vpop.f32.mrf.mxu0
      %v2419 = vadd.f32 %v2327, %v2418
      %v2420 = vpop.f32.mrf.mxu0
      %v2421 = vpop.f32.mrf.mxu0
      %v2422 = vadd.f32 %v2327, %v2421
      %v2423 = vpop.f32.mrf.mxu0
      %2424 = vmatprep.mubr.bf16.mxu0 0
      %2425 = vmatmul.mubr.bf16.gmra.mxu0 %v2317
      %v2426 = vpop.f32.mrf.mxu0
      %v2427 = vadd.f32 %v2327, %v2426
      %v2428 = vpop.f32.mrf.mxu0
      %v2429 = vpop.f32.mrf.mxu0
      %v2430 = vadd.f32 %v2327, %v2429
      %v2431 = vpop.f32.mrf.mxu0
      %2432 = vmatprep.mubr.bf16.mxu0 0
      %2433 = vmatmul.mubr.bf16.gmra.mxu0 %v2318
      %v2434 = vpop.f32.mrf.mxu0
      %v2435 = vadd.f32 %v2327, %v2434
      %v2436 = vpop.f32.mrf.mxu0
      %v2437 = vpop.f32.mrf.mxu0
      %v2438 = vadd.f32 %v2327, %v2437
      %v2439 = vpop.f32.mrf.mxu0
      %2440 = vmatprep.mubr.bf16.mxu0 0
      %2441 = vmatmul.mubr.bf16.gmra.mxu0 %v2319
      %v2442 = vpop.f32.mrf.mxu0
      %v2443 = vadd.f32 %v2327, %v2442
      %v2444 = vpop.f32.mrf.mxu0
      %v2445 = vpop.f32.mrf.mxu0
      %v2446 = vadd.f32 %v2327, %v2445
      %v2447 = vpop.f32.mrf.mxu0
      %2448 = vmatprep.mubr.bf16.mxu0 0
      %2449 = vmatmul.mubr.bf16.gmra.mxu0 %v2320
      %v2450 = vpop.f32.mrf.mxu0
      %v2451 = vadd.f32 %v2327, %v2450
      %v2452 = vpop.f32.mrf.mxu0
      %v2453 = vpop.f32.mrf.mxu0
      %v2454 = vadd.f32 %v2327, %v2453
      %v2455 = vpop.f32.mrf.mxu0
      %2456 = vmatprep.mubr.bf16.mxu0 0
      %2457 = vmatmul.mubr.bf16.gmra.mxu0 %v2321
      %v2458 = vpop.f32.mrf.mxu0
      %v2459 = vadd.f32 %v2327, %v2458
      %v2460 = vpop.f32.mrf.mxu0
      %v2461 = vpop.f32.mrf.mxu0
      %v2462 = vadd.f32 %v2327, %v2461
      %v2463 = vpop.f32.mrf.mxu0
      %2464 = vmatprep.mubr.bf16.mxu0 0
      %2465 = vmatmul.mubr.bf16.gmra.mxu0 %v2322
      %v2466 = vpop.f32.mrf.mxu0
      %v2467 = vadd.f32 %v2327, %v2466
      %v2468 = vpop.f32.mrf.mxu0
      %v2469 = vpop.f32.mrf.mxu0
      %v2470 = vadd.f32 %v2327, %v2469
      %v2471 = vpop.f32.mrf.mxu0
      %2472 = vdwg.mxu0
      %v2473 = vmul.f32 %v2411, 0.5
      %v2474 = vmul.f32 %v2414, 0.5
      %v2475 = vmul.f32 %v2419, 0.5
      %v2476 = vmul.f32 %v2422, 0.5
      %v2477 = vmul.f32 %v2427, 0.5
      %v2478 = vmul.f32 %v2430, 0.5
      %v2479 = vmul.f32 %v2435, 0.5
      %v2480 = vmul.f32 %v2438, 0.5
      %v2481 = vmul.f32 %v2443, 0.5
      %v2482 = vmul.f32 %v2446, 0.5
      %v2483 = vmul.f32 %v2451, 0.5
      %v2484 = vmul.f32 %v2454, 0.5
      %v2485 = vmul.f32 %v2459, 0.5
      %v2486 = vmul.f32 %v2462, 0.5
      %v2487 = vmul.f32 %v2467, 0.5
      %v2488 = vmul.f32 %v2470, 0.5
      %v2489 = vtanh.pop %v2473
      %v2490 = vtanh.pop %v2474
      %v2491 = vtanh.pop %v2475
      %v2492 = vtanh.pop %v2476
      %v2493 = vtanh.pop %v2477
      %v2494 = vtanh.pop %v2478
      %v2495 = vtanh.pop %v2479
      %v2496 = vtanh.pop %v2480
      %v2497 = vtanh.pop %v2481
      %v2498 = vtanh.pop %v2482
      %v2499 = vtanh.pop %v2483
      %v2500 = vtanh.pop %v2484
      %v2501 = vtanh.pop %v2485
      %v2502 = vtanh.pop %v2486
      %v2503 = vtanh.pop %v2487
      %v2504 = vtanh.pop %v2488
      %v2505 = vadd.f32 %v2489, 1.0
      %v2506 = vadd.f32 %v2490, 1.0
      %v2507 = vadd.f32 %v2491, 1.0
      %v2508 = vadd.f32 %v2492, 1.0
      %v2509 = vadd.f32 %v2493, 1.0
      %v2510 = vadd.f32 %v2494, 1.0
      %v2511 = vadd.f32 %v2495, 1.0
      %v2512 = vadd.f32 %v2496, 1.0
      %v2513 = vadd.f32 %v2497, 1.0
      %v2514 = vadd.f32 %v2498, 1.0
      %v2515 = vadd.f32 %v2499, 1.0
      %v2516 = vadd.f32 %v2500, 1.0
      %v2517 = vadd.f32 %v2501, 1.0
      %v2518 = vadd.f32 %v2502, 1.0
      %v2519 = vadd.f32 %v2503, 1.0
      %v2520 = vadd.f32 %v2504, 1.0
      %v2521 = vmul.f32 %v2505, 0.5
      %v2522 = vmul.f32 %v2506, 0.5
      %v2523 = vmul.f32 %v2507, 0.5
      %v2524 = vmul.f32 %v2508, 0.5
      %v2525 = vmul.f32 %v2509, 0.5
      %v2526 = vmul.f32 %v2510, 0.5
      %v2527 = vmul.f32 %v2511, 0.5
      %v2528 = vmul.f32 %v2512, 0.5
      %v2529 = vmul.f32 %v2513, 0.5
      %v2530 = vmul.f32 %v2514, 0.5
      %v2531 = vmul.f32 %v2515, 0.5
      %v2532 = vmul.f32 %v2516, 0.5
      %v2533 = vmul.f32 %v2517, 0.5
      %v2534 = vmul.f32 %v2518, 0.5
      %v2535 = vmul.f32 %v2519, 0.5
      %v2536 = vmul.f32 %v2520, 0.5
      %2537 = vst [vmem:[%s224] sm:$0xff] %v2521
      %2538 = vst [vmem:[%s224 + $0x8] sm:$0xff] %v2522
      %2539 = vst [vmem:[%s224 + $0x10] sm:$0xff] %v2523
      %2540 = vst [vmem:[%s224 + $0x18] sm:$0xff] %v2524
      %2541 = vst [vmem:[%s224 + $0x20] sm:$0xff] %v2525
      %2542 = vst [vmem:[%s224 + $0x28] sm:$0xff] %v2526
      %2543 = vst [vmem:[%s224 + $0x30] sm:$0xff] %v2527
      %2544 = vst [vmem:[%s224 + $0x38] sm:$0xff] %v2528
      %2545 = vst [vmem:[%s224 + $0x40] sm:$0xff] %v2529
      %2546 = vst [vmem:[%s224 + $0x48] sm:$0xff] %v2530
      %2547 = vst [vmem:[%s224 + $0x50] sm:$0xff] %v2531
      %2548 = vst [vmem:[%s224 + $0x58] sm:$0xff] %v2532
      %2549 = vst [vmem:[%s224 + $0x60] sm:$0xff] %v2533
      %2550 = vst [vmem:[%s224 + $0x68] sm:$0xff] %v2534
      %2551 = vst [vmem:[%s224 + $0x70] sm:$0xff] %v2535
      %2552 = vst [vmem:[%s224 + $0x78] sm:$0xff] %v2536
      %s2553 = smul.u32 16, %s15
      %p2554 = scmp.lt.s32.totalorder %s2553, 127
      %s2555 = scalar_select %p2554, %s2553, 127
      %s2556 = smul.addr %s2555, 8
      %s2557 = scalar_lea.vmem %s4, %s2556
      // Predicated region
      $region37: #{spatial_revised_vae.1} parent=35 // pred_check
        %p2558 = pneg %p127
      $region38: #{spatial_revised_vae.1} parent=35 // pred_check_branch
        %2560 = sbr.rel (%p2558) target = $region40
      $region39: #{spatial_revised_vae.1} parent=35 // pred_region
        %s2561 = smul.u32 16, %s15
      $region40: #{spatial_revised_vae.1} parent=35 // pred_fallthru
        _
    $region36: #{spatial_revised_vae.1} parent=5 // pred_fallthru
      _
    %p2562 = scmp.le.s32.totalorder 2, %s10
    // Predicated region
    $region41: #{spatial_revised_vae.1} parent=5 // pred_check
      %p2563 = pneg %p2562
    $region42: #{spatial_revised_vae.1} parent=5 // pred_check_branch
      %2565 = sbr.rel (%p2563) target = $region44
    $region43: #{spatial_revised_vae.1} parent=5 // pred_region
      %s2566 = ssub.s32 %s10, 2
      // Predicated region
      $region45: #{spatial_revised_vae.1} parent=43 // pred_check
        %p2567 = pneg %p133
      $region46: #{spatial_revised_vae.1} parent=43 // pred_check_branch
        %2569 = sbr.rel (%p2567) target = $region48
      $region47: #{spatial_revised_vae.1} parent=43 // pred_region
        %s2570 = smul.u32 16, %s16
        %p2571 = scmp.lt.s32.totalorder %s2570, 127
        %s2572 = scalar_select %p2571, %s2570, 127
        %s2573 = smul.addr %s2572, 8
        %s2574 = scalar_lea.vmem %s4, %s2573
      $region48: #{spatial_revised_vae.1} parent=43 // pred_fallthru
        _
    $region44: #{spatial_revised_vae.1} parent=5 // pred_fallthru
      _
  $region6: #{spatial_revised_vae.1} parent=0 // loop_footer
    %s14 = sadd.s32 1, %s10
  $region7: #{spatial_revised_vae.1} parent=0 // loop_footer_branch
    %9 = sbr.rel target = $region3
  $region8: #{spatial_revised_vae.1} parent=0 // loop_exit
    _

</llo_original>
